<compile_context>
chip_gen: v6e
topology: v6e:2x2x1
jax: 0.10.0
libtpu: 0.0.40
codegen_flags: <defaults>
</compile_context>

<pallas_src>
import math
import jax
import jax.numpy as jnp
from jax.experimental import pallas as pl
from jax.experimental.pallas import tpu as pltpu

# ----- module hyper-parameters (small, consistent with the PyTorch module) -----
TIME_DIM   = 32     # time_dim
COND_DIM   = 32     # cond_dim
OUTPUT_DIM = 16     # output_dim
HIDDEN_DIM = 64     # hidden_dim
NUM_BLOCKS = 4      # num_blocks
LN_EPS     = 1e-5   # PyTorch nn.LayerNorm default
INPUT_DIM  = TIME_DIM + COND_DIM + OUTPUT_DIM
CS_DIM     = COND_DIM + OUTPUT_DIM           # concat(condition, sample) width

COMPUTE_DTYPE = jnp.bfloat16                 # MXU input dtype (f32 accumulation)

PARAM_ORDER = ["w1t", "b1t", "w2t", "b2t",
               "wenc", "benc",
               "ln_g", "ln_b", "bw1", "bb1", "bw2", "bb2",
               "wdec", "bdec"]


def _gelu(x):
    # TODO(synk): timm Mlp default act is exact-erf nn.GELU; tanh-approx GELU used
    # here to guarantee Mosaic lowering (difference is ~1e-3 relative).
    return jax.nn.gelu(x, approximate=True)


def _silu(x):
    return x * jax.nn.sigmoid(x)


def _layernorm(x, g, b):
    mu = jnp.mean(x, axis=-1, keepdims=True)
    var = jnp.mean(jnp.square(x - mu), axis=-1, keepdims=True)
    return (x - mu) * jax.lax.rsqrt(var + LN_EPS) * g + b


# ----------------------------- Pallas kernel ----------------------------------
def diffusion_kernel(t_ref, cs_ref, freqs_ref,
                     w1t_ref, b1t_ref, w2t_ref, b2t_ref,
                     wenc_ref, benc_ref,
                     ln_g_ref, ln_b_ref, bw1_ref, bb1_ref, bw2_ref, bb2_ref,
                     wdec_ref, bdec_ref,
                     out_ref):
    half = TIME_DIM // 2

    # --- SinusoidalPosEmb (frequency table precomputed in the wrapper) ---
    arg = t_ref[...] * freqs_ref[...]                            # (TB, half) f32
    s = jnp.sin(arg).astype(COMPUTE_DTYPE)
    c = jnp.cos(arg).astype(COMPUTE_DTYPE)

    # --- time Mlp: fc1 (split rows <=> concat(sin, cos) input), GELU, fc2 ---
    w1t = w1t_ref[...]                                           # (TIME_DIM, 4*TIME_DIM) bf16
    h = (jnp.dot(s, w1t[:half, :], preferred_element_type=jnp.float32)
         + jnp.dot(c, w1t[half:, :], preferred_element_type=jnp.float32)
         + b1t_ref[...])                                         # f32
    h = _gelu(h)
    tf = (jnp.dot(h.astype(COMPUTE_DTYPE), w2t_ref[...],
                  preferred_element_type=jnp.float32)
          + b2t_ref[...])                                        # (TB, TIME_DIM) f32

    # --- encoder Linear on concat([time_feat, condition, sample]) ---
    wenc = wenc_ref[...]                                         # (INPUT_DIM, HIDDEN_DIM) bf16
    x = (jnp.dot(tf.astype(COMPUTE_DTYPE), wenc[:TIME_DIM, :],
                 preferred_element_type=jnp.float32)
         + jnp.dot(cs_ref[...], wenc[TIME_DIM:, :],
                   preferred_element_type=jnp.float32)
         + benc_ref[...])                                        # (TB, HIDDEN_DIM) f32

    # --- residual blocks (dropout == identity in eval) ---
    for i in range(NUM_BLOCKS):
        residual = x
        y = _layernorm(x, ln_g_ref[i], ln_b_ref[i])
        y = (jnp.dot(y.astype(COMPUTE_DTYPE), bw1_ref[i],
                     preferred_element_type=jnp.float32) + bb1_ref[i])
        y = _silu(y)
        y = (jnp.dot(y.astype(COMPUTE_DTYPE), bw2_ref[i],
                     preferred_element_type=jnp.float32) + bb2_ref[i])
        x = residual + y

    # --- decoder ---
    x = _silu(x)
    out_ref[...] = (jnp.dot(x.astype(COMPUTE_DTYPE), wdec_ref[...],
                            preferred_element_type=jnp.float32)
                    + bdec_ref[...]).astype(out_ref.dtype)


# ------------------------------- wrapper ---------------------------------------
def conditioned_diffusion_forward(sample, t, condition, params, *, batch_tile=None):
    B = sample.shape[0]
    if batch_tile is None:
        # Whole batch in one step for small B; 128-row tiles otherwise
        # (fills a 128-wide MXU, v5e-spill-safe; pass batch_tile=256 on v6e/v7x,
        #  or smaller on v7x to keep >=2 parallel steps for both TensorCores).
        batch_tile = B if B <= 128 else 128

    # Pad batch to a multiple of the tile; slice back after the call.
    Bp = ((B + batch_tile - 1) // batch_tile) * batch_tile

    t2 = t.astype(jnp.float32).reshape(B, 1)
    cs = jnp.concatenate([condition.astype(jnp.float32),
                          sample.astype(jnp.float32)], axis=-1).astype(COMPUTE_DTYPE)
    if Bp != B:
        t2 = jnp.pad(t2, ((0, Bp - B), (0, 0)))
        cs = jnp.pad(cs, ((0, Bp - B), (0, 0)))

    # Hoisted sinusoidal frequency table (compile-time constant of the module).
    half = TIME_DIM // 2
    freqs = jnp.exp(jnp.arange(half, dtype=jnp.float32)
                    * (-math.log(10000.0) / (half - 1))).reshape(1, half)

    def batch_spec(d):
        return pl.BlockSpec((batch_tile, d), lambda i: (i, 0))

    def full_spec(shape):
        nd = len(shape)
        return pl.BlockSpec(shape, lambda i, _nd=nd: (0,) * _nd)

    param_list = [params[name] for name in PARAM_ORDER]
    in_specs = ([batch_spec(1), batch_spec(CS_DIM), full_spec(freqs.shape)]
                + [full_spec(p.shape) for p in param_list])

    out = pl.pallas_call(
        diffusion_kernel,
        out_shape=jax.ShapeDtypeStruct((Bp, OUTPUT_DIM), jnp.float32),
        grid=(Bp // batch_tile,),
        in_specs=in_specs,
        out_specs=batch_spec(OUTPUT_DIM),
        compiler_params=pltpu.CompilerParams(dimension_semantics=("parallel",)),
    )(t2, cs, freqs, *param_list)
    return out[:B]


# --------------------------- deterministic params ------------------------------
def init_params(key):
    ks = jax.random.split(key, 16)

    def w(k, shape, scale=0.02, dtype=COMPUTE_DTYPE):
        return (scale * jax.random.normal(k, shape)).astype(dtype)

    return dict(
        # time_encoder Mlp(TIME_DIM, 4*TIME_DIM) — weights bf16, biases f32
        w1t=w(ks[0], (TIME_DIM, 4 * TIME_DIM)),
        b1t=w(ks[1], (1, 4 * TIME_DIM), dtype=jnp.float32),
        w2t=w(ks[2], (4 * TIME_DIM, TIME_DIM)),
        b2t=w(ks[3], (1, TIME_DIM), dtype=jnp.float32),
        # MLPResNet encoder
        wenc=w(ks[4], (INPUT_DIM, HIDDEN_DIM)),
        benc=w(ks[5], (1, HIDDEN_DIM), dtype=jnp.float32),
        # residual blocks (stacked over NUM_BLOCKS); LN params f32
        ln_g=jnp.ones((NUM_BLOCKS, 1, HIDDEN_DIM), jnp.float32),
        ln_b=jnp.zeros((NUM_BLOCKS, 1, HIDDEN_DIM), jnp.float32),
        bw1=w(ks[6], (NUM_BLOCKS, HIDDEN_DIM, 4 * HIDDEN_DIM)),
        bb1=w(ks[7], (NUM_BLOCKS, 1, 4 * HIDDEN_DIM), dtype=jnp.float32),
        bw2=w(ks[8], (NUM_BLOCKS, 4 * HIDDEN_DIM, HIDDEN_DIM)),
        bb2=w(ks[9], (NUM_BLOCKS, 1, HIDDEN_DIM), dtype=jnp.float32),
        # MLPResNet decoder
        wdec=w(ks[10], (HIDDEN_DIM, OUTPUT_DIM)),
        bdec=w(ks[11], (1, OUTPUT_DIM), dtype=jnp.float32),
    )


# --------------------------- pure-JAX reference --------------------------------
def reference_forward(sample, t, condition, p):
    # f32 math with the (bf16) weights up-cast; the kernel additionally rounds
    # matmul *activations* to bf16, hence the loosened comparison tolerance.
    f32 = lambda a: jnp.asarray(a, jnp.float32)
    half = TIME_DIM // 2
    freqs = jnp.exp(jnp.arange(half, dtype=jnp.float32) * (-math.log(10000.0) / (half - 1)))
    emb = t.astype(jnp.float32)[:, None] * freqs[None, :]
    emb = jnp.concatenate([jnp.sin(emb), jnp.cos(emb)], axis=-1)
    tf = _gelu(emb @ f32(p["w1t"]) + p["b1t"]) @ f32(p["w2t"]) + p["b2t"]
    x = jnp.concatenate([tf, condition.astype(jnp.float32), sample.astype(jnp.float32)], axis=-1)
    x = x @ f32(p["wenc"]) + p["benc"]
    for i in range(NUM_BLOCKS):
        r = x
        y = _layernorm(x, p["ln_g"][i], p["ln_b"][i])
        y = _silu(y @ f32(p["bw1"][i]) + p["bb1"][i]) @ f32(p["bw2"][i]) + p["bb2"][i]
        x = r + y
    return _silu(x) @ f32(p["wdec"]) + p["bdec"]


if __name__ == "__main__":
    key = jax.random.PRNGKey(0)
    k_param, k_sample, k_t, k_cond = jax.random.split(key, 4)

    B = 16
    params = init_params(k_param)
    sample = jax.random.normal(k_sample, (B, OUTPUT_DIM), dtype=jnp.float32)
    t = jax.random.randint(k_t, (B,), 0, 1000).astype(jnp.float32)   # diffusion timesteps
    condition = jax.random.normal(k_cond, (B, COND_DIM), dtype=jnp.float32)

    out = conditioned_diffusion_forward(sample, t, condition, params)
    out = jax.block_until_ready(out)

    ref = reference_forward(sample, t, condition, params)
    assert out.shape == (B, OUTPUT_DIM)
    # bf16 matmul inputs (f32 accumulation) -> relaxed tolerance vs f32 reference.
    assert jnp.allclose(out, ref, atol=1e-2, rtol=1e-2), \
        f"max abs err = {jnp.max(jnp.abs(out - ref))}"

    print("KERNEL_OK")
</pallas_src>

<mosaic_0001>
module attributes {stable_mosaic.version = 11 : i64} {
  func.func @diffusion_kernel(%arg0: i32, %arg1: memref<16x1xf32, #tpu.memory_space<vmem>>, %arg2: memref<16x48xbf16, #tpu.memory_space<vmem>>, %arg3: memref<1x16xf32, #tpu.memory_space<vmem>>, %arg4: memref<32x128xbf16, #tpu.memory_space<vmem>>, %arg5: memref<1x128xf32, #tpu.memory_space<vmem>>, %arg6: memref<128x32xbf16, #tpu.memory_space<vmem>>, %arg7: memref<1x32xf32, #tpu.memory_space<vmem>>, %arg8: memref<80x64xbf16, #tpu.memory_space<vmem>>, %arg9: memref<1x64xf32, #tpu.memory_space<vmem>>, %arg10: memref<4x1x64xf32, #tpu.memory_space<vmem>>, %arg11: memref<4x1x64xf32, #tpu.memory_space<vmem>>, %arg12: memref<4x64x256xbf16, #tpu.memory_space<vmem>>, %arg13: memref<4x1x256xf32, #tpu.memory_space<vmem>>, %arg14: memref<4x256x64xbf16, #tpu.memory_space<vmem>>, %arg15: memref<4x1x64xf32, #tpu.memory_space<vmem>>, %arg16: memref<64x16xbf16, #tpu.memory_space<vmem>>, %arg17: memref<1x16xf32, #tpu.memory_space<vmem>>, %arg18: memref<16x16xf32, #tpu.memory_space<vmem>>) attributes {dimension_semantics = [#tpu.dimension_semantics<parallel>], iteration_bounds = array<i64: 1>, scalar_prefetch = 0 : i64, scratch_operands = 0 : i64, tpu.core_type = #tpu.core_type<tc>, window_params = [{transform_indices = @transform_0, window_bounds = array<i64: 16, 1>}, {transform_indices = @transform_1, window_bounds = array<i64: 16, 48>}, {pipeline_mode = #tpu.pipeline_mode<synchronous>, transform_indices = @transform_2, window_bounds = array<i64: 1, 16>}, {pipeline_mode = #tpu.pipeline_mode<synchronous>, transform_indices = @transform_3, window_bounds = array<i64: 32, 128>}, {pipeline_mode = #tpu.pipeline_mode<synchronous>, transform_indices = @transform_4, window_bounds = array<i64: 1, 128>}, {pipeline_mode = #tpu.pipeline_mode<synchronous>, transform_indices = @transform_5, window_bounds = array<i64: 128, 32>}, {pipeline_mode = #tpu.pipeline_mode<synchronous>, transform_indices = @transform_6, window_bounds = array<i64: 1, 32>}, {pipeline_mode = #tpu.pipeline_mode<synchronous>, transform_indices = @transform_7, window_bounds = array<i64: 80, 64>}, {pipeline_mode = #tpu.pipeline_mode<synchronous>, transform_indices = @transform_8, window_bounds = array<i64: 1, 64>}, {pipeline_mode = #tpu.pipeline_mode<synchronous>, transform_indices = @transform_9, window_bounds = array<i64: 4, 1, 64>}, {pipeline_mode = #tpu.pipeline_mode<synchronous>, transform_indices = @transform_10, window_bounds = array<i64: 4, 1, 64>}, {pipeline_mode = #tpu.pipeline_mode<synchronous>, transform_indices = @transform_11, window_bounds = array<i64: 4, 64, 256>}, {pipeline_mode = #tpu.pipeline_mode<synchronous>, transform_indices = @transform_12, window_bounds = array<i64: 4, 1, 256>}, {pipeline_mode = #tpu.pipeline_mode<synchronous>, transform_indices = @transform_13, window_bounds = array<i64: 4, 256, 64>}, {pipeline_mode = #tpu.pipeline_mode<synchronous>, transform_indices = @transform_14, window_bounds = array<i64: 4, 1, 64>}, {pipeline_mode = #tpu.pipeline_mode<synchronous>, transform_indices = @transform_15, window_bounds = array<i64: 64, 16>}, {pipeline_mode = #tpu.pipeline_mode<synchronous>, transform_indices = @transform_16, window_bounds = array<i64: 1, 16>}, {transform_indices = @transform_17, window_bounds = array<i64: 16, 16>}]} {
    %c0 = arith.constant 0 : index
    %c0_0 = arith.constant 0 : index
    %0 = vector.load %arg1[%c0, %c0_0] : memref<16x1xf32, #tpu.memory_space<vmem>>, vector<16x1xf32>
    %c0_1 = arith.constant 0 : index
    %c0_2 = arith.constant 0 : index
    %1 = vector.load %arg3[%c0_1, %c0_2] : memref<1x16xf32, #tpu.memory_space<vmem>>, vector<1x16xf32>
    %2 = vector.broadcast %0 : vector<16x1xf32> to vector<16x16xf32>
    %3 = vector.broadcast %1 : vector<1x16xf32> to vector<16x16xf32>
    %4 = arith.mulf %2, %3 : vector<16x16xf32>
    %5 = math.sin %4 : vector<16x16xf32>
    %6 = arith.truncf %5 : vector<16x16xf32> to vector<16x16xbf16>
    %7 = math.cos %4 : vector<16x16xf32>
    %8 = arith.truncf %7 : vector<16x16xf32> to vector<16x16xbf16>
    %c0_3 = arith.constant 0 : index
    %c0_4 = arith.constant 0 : index
    %9 = vector.load %arg4[%c0_3, %c0_4] : memref<32x128xbf16, #tpu.memory_space<vmem>>, vector<32x128xbf16>
    %10 = vector.extract_strided_slice %9 {offsets = [0, 0], sizes = [16, 128], strides = [1, 1]} : vector<32x128xbf16> to vector<16x128xbf16>
    %cst = arith.constant dense<0.000000e+00> : vector<16x128xf32>
    %11 = tpu.matmul %6, %10, %cst {dimension_numbers = #tpu.dot_dimension_numbers<[1], [0], [0], [1], [0, 0, 1, 1], [], []>} : vector<16x16xbf16>, vector<16x128xbf16>, vector<16x128xf32> -> vector<16x128xf32>
    %12 = vector.extract_strided_slice %9 {offsets = [16, 0], sizes = [16, 128], strides = [1, 1]} : vector<32x128xbf16> to vector<16x128xbf16>
    %cst_5 = arith.constant dense<0.000000e+00> : vector<16x128xf32>
    %13 = tpu.matmul %8, %12, %cst_5 {dimension_numbers = #tpu.dot_dimension_numbers<[1], [0], [0], [1], [0, 0, 1, 1], [], []>} : vector<16x16xbf16>, vector<16x128xbf16>, vector<16x128xf32> -> vector<16x128xf32>
    %14 = arith.addf %11, %13 : vector<16x128xf32>
    %c0_6 = arith.constant 0 : index
    %c0_7 = arith.constant 0 : index
    %15 = vector.load %arg5[%c0_6, %c0_7] : memref<1x128xf32, #tpu.memory_space<vmem>>, vector<1x128xf32>
    %16 = vector.broadcast %15 : vector<1x128xf32> to vector<16x128xf32>
    %17 = arith.addf %14, %16 : vector<16x128xf32>
    %18 = arith.mulf %17, %17 : vector<16x128xf32>
    %19 = arith.mulf %17, %18 : vector<16x128xf32>
    %cst_8 = arith.constant 4.471500e-02 : f32
    %20 = vector.broadcast %cst_8 : f32 to vector<16x128xf32>
    %21 = arith.mulf %20, %19 : vector<16x128xf32>
    %22 = arith.addf %17, %21 : vector<16x128xf32>
    %cst_9 = arith.constant 0.797884583 : f32
    %23 = vector.broadcast %cst_9 : f32 to vector<16x128xf32>
    %24 = arith.mulf %23, %22 : vector<16x128xf32>
    %25 = math.tanh %24 : vector<16x128xf32>
    %cst_10 = arith.constant 1.000000e+00 : f32
    %26 = vector.broadcast %cst_10 : f32 to vector<16x128xf32>
    %27 = arith.addf %26, %25 : vector<16x128xf32>
    %cst_11 = arith.constant 5.000000e-01 : f32
    %28 = vector.broadcast %cst_11 : f32 to vector<16x128xf32>
    %29 = arith.mulf %28, %27 : vector<16x128xf32>
    %30 = arith.mulf %17, %29 : vector<16x128xf32>
    %31 = arith.truncf %30 : vector<16x128xf32> to vector<16x128xbf16>
    %c0_12 = arith.constant 0 : index
    %c0_13 = arith.constant 0 : index
    %32 = vector.load %arg6[%c0_12, %c0_13] : memref<128x32xbf16, #tpu.memory_space<vmem>>, vector<128x32xbf16>
    %cst_14 = arith.constant dense<0.000000e+00> : vector<16x32xf32>
    %33 = tpu.matmul %31, %32, %cst_14 {dimension_numbers = #tpu.dot_dimension_numbers<[1], [0], [0], [1], [0, 0, 1, 1], [], []>} : vector<16x128xbf16>, vector<128x32xbf16>, vector<16x32xf32> -> vector<16x32xf32>
    %c0_15 = arith.constant 0 : index
    %c0_16 = arith.constant 0 : index
    %34 = vector.load %arg7[%c0_15, %c0_16] : memref<1x32xf32, #tpu.memory_space<vmem>>, vector<1x32xf32>
    %35 = vector.broadcast %34 : vector<1x32xf32> to vector<16x32xf32>
    %36 = arith.addf %33, %35 : vector<16x32xf32>
    %c0_17 = arith.constant 0 : index
    %c0_18 = arith.constant 0 : index
    %37 = vector.load %arg8[%c0_17, %c0_18] : memref<80x64xbf16, #tpu.memory_space<vmem>>, vector<80x64xbf16>
    %38 = arith.truncf %36 : vector<16x32xf32> to vector<16x32xbf16>
    %39 = vector.extract_strided_slice %37 {offsets = [0, 0], sizes = [32, 64], strides = [1, 1]} : vector<80x64xbf16> to vector<32x64xbf16>
    %cst_19 = arith.constant dense<0.000000e+00> : vector<16x64xf32>
    %40 = tpu.matmul %38, %39, %cst_19 {dimension_numbers = #tpu.dot_dimension_numbers<[1], [0], [0], [1], [0, 0, 1, 1], [], []>} : vector<16x32xbf16>, vector<32x64xbf16>, vector<16x64xf32> -> vector<16x64xf32>
    %c0_20 = arith.constant 0 : index
    %c0_21 = arith.constant 0 : index
    %41 = vector.load %arg2[%c0_20, %c0_21] : memref<16x48xbf16, #tpu.memory_space<vmem>>, vector<16x48xbf16>
    %42 = vector.extract_strided_slice %37 {offsets = [32, 0], sizes = [48, 64], strides = [1, 1]} : vector<80x64xbf16> to vector<48x64xbf16>
    %cst_22 = arith.constant dense<0.000000e+00> : vector<16x64xf32>
    %43 = tpu.matmul %41, %42, %cst_22 {dimension_numbers = #tpu.dot_dimension_numbers<[1], [0], [0], [1], [0, 0, 1, 1], [], []>} : vector<16x48xbf16>, vector<48x64xbf16>, vector<16x64xf32> -> vector<16x64xf32>
    %44 = arith.addf %40, %43 : vector<16x64xf32>
    %c0_23 = arith.constant 0 : index
    %c0_24 = arith.constant 0 : index
    %45 = vector.load %arg9[%c0_23, %c0_24] : memref<1x64xf32, #tpu.memory_space<vmem>>, vector<1x64xf32>
    %46 = vector.broadcast %45 : vector<1x64xf32> to vector<16x64xf32>
    %47 = arith.addf %44, %46 : vector<16x64xf32>
    %c0_25 = arith.constant 0 : index
    %c0_26 = arith.constant 0 : index
    %c0_27 = arith.constant 0 : index
    %48 = vector.load %arg10[%c0_25, %c0_26, %c0_27] : memref<4x1x64xf32, #tpu.memory_space<vmem>>, vector<1x1x64xf32>
    %49 = vector.shape_cast %48 : vector<1x1x64xf32> to vector<1x64xf32>
    %c0_28 = arith.constant 0 : index
    %c0_29 = arith.constant 0 : index
    %c0_30 = arith.constant 0 : index
    %50 = vector.load %arg11[%c0_28, %c0_29, %c0_30] : memref<4x1x64xf32, #tpu.memory_space<vmem>>, vector<1x1x64xf32>
    %51 = vector.shape_cast %50 : vector<1x1x64xf32> to vector<1x64xf32>
    %cst_31 = arith.constant dense<0.000000e+00> : vector<16xf32>
    %52 = vector.multi_reduction <add>, %47, %cst_31 [1] : vector<16x64xf32> to vector<16xf32>
    %53 = vector.shape_cast %52 : vector<16xf32> to vector<16x1xf32>
    %cst_32 = arith.constant 6.400000e+01 : f32
    %54 = vector.broadcast %cst_32 : f32 to vector<16x1xf32>
    %55 = arith.divf %53, %54 : vector<16x1xf32>
    %56 = vector.broadcast %55 : vector<16x1xf32> to vector<16x64xf32>
    %57 = arith.subf %47, %56 : vector<16x64xf32>
    %58 = arith.mulf %57, %57 : vector<16x64xf32>
    %cst_33 = arith.constant dense<0.000000e+00> : vector<16xf32>
    %59 = vector.multi_reduction <add>, %58, %cst_33 [1] : vector<16x64xf32> to vector<16xf32>
    %60 = vector.shape_cast %59 : vector<16xf32> to vector<16x1xf32>
    %cst_34 = arith.constant 6.400000e+01 : f32
    %61 = vector.broadcast %cst_34 : f32 to vector<16x1xf32>
    %62 = arith.divf %60, %61 : vector<16x1xf32>
    %63 = vector.broadcast %55 : vector<16x1xf32> to vector<16x64xf32>
    %64 = arith.subf %47, %63 : vector<16x64xf32>
    %cst_35 = arith.constant 9.99999974E-6 : f32
    %65 = vector.broadcast %cst_35 : f32 to vector<16x1xf32>
    %66 = arith.addf %62, %65 : vector<16x1xf32>
    %67 = math.rsqrt %66 : vector<16x1xf32>
    %68 = vector.broadcast %67 : vector<16x1xf32> to vector<16x64xf32>
    %69 = arith.mulf %64, %68 : vector<16x64xf32>
    %70 = vector.broadcast %49 : vector<1x64xf32> to vector<16x64xf32>
    %71 = arith.mulf %69, %70 : vector<16x64xf32>
    %72 = vector.broadcast %51 : vector<1x64xf32> to vector<16x64xf32>
    %73 = arith.addf %71, %72 : vector<16x64xf32>
    %74 = arith.truncf %73 : vector<16x64xf32> to vector<16x64xbf16>
    %c0_36 = arith.constant 0 : index
    %c0_37 = arith.constant 0 : index
    %c0_38 = arith.constant 0 : index
    %75 = vector.load %arg12[%c0_36, %c0_37, %c0_38] : memref<4x64x256xbf16, #tpu.memory_space<vmem>>, vector<1x64x256xbf16>
    %76 = vector.shape_cast %75 : vector<1x64x256xbf16> to vector<64x256xbf16>
    %cst_39 = arith.constant dense<0.000000e+00> : vector<16x256xf32>
    %77 = tpu.matmul %74, %76, %cst_39 {dimension_numbers = #tpu.dot_dimension_numbers<[1], [0], [0], [1], [0, 0, 1, 1], [], []>} : vector<16x64xbf16>, vector<64x256xbf16>, vector<16x256xf32> -> vector<16x256xf32>
    %c0_40 = arith.constant 0 : index
    %c0_41 = arith.constant 0 : index
    %c0_42 = arith.constant 0 : index
    %78 = vector.load %arg13[%c0_40, %c0_41, %c0_42] : memref<4x1x256xf32, #tpu.memory_space<vmem>>, vector<1x1x256xf32>
    %79 = vector.shape_cast %78 : vector<1x1x256xf32> to vector<1x256xf32>
    %80 = vector.broadcast %79 : vector<1x256xf32> to vector<16x256xf32>
    %81 = arith.addf %77, %80 : vector<16x256xf32>
    %82 = arith.negf %81 : vector<16x256xf32>
    %83 = math.exp %82 : vector<16x256xf32>
    %cst_43 = arith.constant 1.000000e+00 : f32
    %84 = vector.broadcast %cst_43 : f32 to vector<16x256xf32>
    %85 = arith.addf %84, %83 : vector<16x256xf32>
    %86 = arith.divf %84, %85 : vector<16x256xf32>
    %87 = arith.mulf %81, %86 : vector<16x256xf32>
    %88 = arith.truncf %87 : vector<16x256xf32> to vector<16x256xbf16>
    %c0_44 = arith.constant 0 : index
    %c0_45 = arith.constant 0 : index
    %c0_46 = arith.constant 0 : index
    %89 = vector.load %arg14[%c0_44, %c0_45, %c0_46] : memref<4x256x64xbf16, #tpu.memory_space<vmem>>, vector<1x256x64xbf16>
    %90 = vector.shape_cast %89 : vector<1x256x64xbf16> to vector<256x64xbf16>
    %cst_47 = arith.constant dense<0.000000e+00> : vector<16x64xf32>
    %91 = tpu.matmul %88, %90, %cst_47 {dimension_numbers = #tpu.dot_dimension_numbers<[1], [0], [0], [1], [0, 0, 1, 1], [], []>} : vector<16x256xbf16>, vector<256x64xbf16>, vector<16x64xf32> -> vector<16x64xf32>
    %c0_48 = arith.constant 0 : index
    %c0_49 = arith.constant 0 : index
    %c0_50 = arith.constant 0 : index
    %92 = vector.load %arg15[%c0_48, %c0_49, %c0_50] : memref<4x1x64xf32, #tpu.memory_space<vmem>>, vector<1x1x64xf32>
    %93 = vector.shape_cast %92 : vector<1x1x64xf32> to vector<1x64xf32>
    %94 = vector.broadcast %93 : vector<1x64xf32> to vector<16x64xf32>
    %95 = arith.addf %91, %94 : vector<16x64xf32>
    %96 = arith.addf %47, %95 : vector<16x64xf32>
    %c1 = arith.constant 1 : index
    %c0_51 = arith.constant 0 : index
    %c0_52 = arith.constant 0 : index
    %97 = vector.load %arg10[%c1, %c0_51, %c0_52] : memref<4x1x64xf32, #tpu.memory_space<vmem>>, vector<1x1x64xf32>
    %98 = vector.shape_cast %97 : vector<1x1x64xf32> to vector<1x64xf32>
    %c1_53 = arith.constant 1 : index
    %c0_54 = arith.constant 0 : index
    %c0_55 = arith.constant 0 : index
    %99 = vector.load %arg11[%c1_53, %c0_54, %c0_55] : memref<4x1x64xf32, #tpu.memory_space<vmem>>, vector<1x1x64xf32>
    %100 = vector.shape_cast %99 : vector<1x1x64xf32> to vector<1x64xf32>
    %cst_56 = arith.constant dense<0.000000e+00> : vector<16xf32>
    %101 = vector.multi_reduction <add>, %96, %cst_56 [1] : vector<16x64xf32> to vector<16xf32>
    %102 = vector.shape_cast %101 : vector<16xf32> to vector<16x1xf32>
    %cst_57 = arith.constant 6.400000e+01 : f32
    %103 = vector.broadcast %cst_57 : f32 to vector<16x1xf32>
    %104 = arith.divf %102, %103 : vector<16x1xf32>
    %105 = vector.broadcast %104 : vector<16x1xf32> to vector<16x64xf32>
    %106 = arith.subf %96, %105 : vector<16x64xf32>
    %107 = arith.mulf %106, %106 : vector<16x64xf32>
    %cst_58 = arith.constant dense<0.000000e+00> : vector<16xf32>
    %108 = vector.multi_reduction <add>, %107, %cst_58 [1] : vector<16x64xf32> to vector<16xf32>
    %109 = vector.shape_cast %108 : vector<16xf32> to vector<16x1xf32>
    %cst_59 = arith.constant 6.400000e+01 : f32
    %110 = vector.broadcast %cst_59 : f32 to vector<16x1xf32>
    %111 = arith.divf %109, %110 : vector<16x1xf32>
    %112 = vector.broadcast %104 : vector<16x1xf32> to vector<16x64xf32>
    %113 = arith.subf %96, %112 : vector<16x64xf32>
    %cst_60 = arith.constant 9.99999974E-6 : f32
    %114 = vector.broadcast %cst_60 : f32 to vector<16x1xf32>
    %115 = arith.addf %111, %114 : vector<16x1xf32>
    %116 = math.rsqrt %115 : vector<16x1xf32>
    %117 = vector.broadcast %116 : vector<16x1xf32> to vector<16x64xf32>
    %118 = arith.mulf %113, %117 : vector<16x64xf32>
    %119 = vector.broadcast %98 : vector<1x64xf32> to vector<16x64xf32>
    %120 = arith.mulf %118, %119 : vector<16x64xf32>
    %121 = vector.broadcast %100 : vector<1x64xf32> to vector<16x64xf32>
    %122 = arith.addf %120, %121 : vector<16x64xf32>
    %123 = arith.truncf %122 : vector<16x64xf32> to vector<16x64xbf16>
    %c1_61 = arith.constant 1 : index
    %c0_62 = arith.constant 0 : index
    %c0_63 = arith.constant 0 : index
    %124 = vector.load %arg12[%c1_61, %c0_62, %c0_63] : memref<4x64x256xbf16, #tpu.memory_space<vmem>>, vector<1x64x256xbf16>
    %125 = vector.shape_cast %124 : vector<1x64x256xbf16> to vector<64x256xbf16>
    %cst_64 = arith.constant dense<0.000000e+00> : vector<16x256xf32>
    %126 = tpu.matmul %123, %125, %cst_64 {dimension_numbers = #tpu.dot_dimension_numbers<[1], [0], [0], [1], [0, 0, 1, 1], [], []>} : vector<16x64xbf16>, vector<64x256xbf16>, vector<16x256xf32> -> vector<16x256xf32>
    %c1_65 = arith.constant 1 : index
    %c0_66 = arith.constant 0 : index
    %c0_67 = arith.constant 0 : index
    %127 = vector.load %arg13[%c1_65, %c0_66, %c0_67] : memref<4x1x256xf32, #tpu.memory_space<vmem>>, vector<1x1x256xf32>
    %128 = vector.shape_cast %127 : vector<1x1x256xf32> to vector<1x256xf32>
    %129 = vector.broadcast %128 : vector<1x256xf32> to vector<16x256xf32>
    %130 = arith.addf %126, %129 : vector<16x256xf32>
    %131 = arith.negf %130 : vector<16x256xf32>
    %132 = math.exp %131 : vector<16x256xf32>
    %cst_68 = arith.constant 1.000000e+00 : f32
    %133 = vector.broadcast %cst_68 : f32 to vector<16x256xf32>
    %134 = arith.addf %133, %132 : vector<16x256xf32>
    %135 = arith.divf %133, %134 : vector<16x256xf32>
    %136 = arith.mulf %130, %135 : vector<16x256xf32>
    %137 = arith.truncf %136 : vector<16x256xf32> to vector<16x256xbf16>
    %c1_69 = arith.constant 1 : index
    %c0_70 = arith.constant 0 : index
    %c0_71 = arith.constant 0 : index
    %138 = vector.load %arg14[%c1_69, %c0_70, %c0_71] : memref<4x256x64xbf16, #tpu.memory_space<vmem>>, vector<1x256x64xbf16>
    %139 = vector.shape_cast %138 : vector<1x256x64xbf16> to vector<256x64xbf16>
    %cst_72 = arith.constant dense<0.000000e+00> : vector<16x64xf32>
    %140 = tpu.matmul %137, %139, %cst_72 {dimension_numbers = #tpu.dot_dimension_numbers<[1], [0], [0], [1], [0, 0, 1, 1], [], []>} : vector<16x256xbf16>, vector<256x64xbf16>, vector<16x64xf32> -> vector<16x64xf32>
    %c1_73 = arith.constant 1 : index
    %c0_74 = arith.constant 0 : index
    %c0_75 = arith.constant 0 : index
    %141 = vector.load %arg15[%c1_73, %c0_74, %c0_75] : memref<4x1x64xf32, #tpu.memory_space<vmem>>, vector<1x1x64xf32>
    %142 = vector.shape_cast %141 : vector<1x1x64xf32> to vector<1x64xf32>
    %143 = vector.broadcast %142 : vector<1x64xf32> to vector<16x64xf32>
    %144 = arith.addf %140, %143 : vector<16x64xf32>
    %145 = arith.addf %96, %144 : vector<16x64xf32>
    %c2 = arith.constant 2 : index
    %c0_76 = arith.constant 0 : index
    %c0_77 = arith.constant 0 : index
    %146 = vector.load %arg10[%c2, %c0_76, %c0_77] : memref<4x1x64xf32, #tpu.memory_space<vmem>>, vector<1x1x64xf32>
    %147 = vector.shape_cast %146 : vector<1x1x64xf32> to vector<1x64xf32>
    %c2_78 = arith.constant 2 : index
    %c0_79 = arith.constant 0 : index
    %c0_80 = arith.constant 0 : index
    %148 = vector.load %arg11[%c2_78, %c0_79, %c0_80] : memref<4x1x64xf32, #tpu.memory_space<vmem>>, vector<1x1x64xf32>
    %149 = vector.shape_cast %148 : vector<1x1x64xf32> to vector<1x64xf32>
    %cst_81 = arith.constant dense<0.000000e+00> : vector<16xf32>
    %150 = vector.multi_reduction <add>, %145, %cst_81 [1] : vector<16x64xf32> to vector<16xf32>
    %151 = vector.shape_cast %150 : vector<16xf32> to vector<16x1xf32>
    %cst_82 = arith.constant 6.400000e+01 : f32
    %152 = vector.broadcast %cst_82 : f32 to vector<16x1xf32>
    %153 = arith.divf %151, %152 : vector<16x1xf32>
    %154 = vector.broadcast %153 : vector<16x1xf32> to vector<16x64xf32>
    %155 = arith.subf %145, %154 : vector<16x64xf32>
    %156 = arith.mulf %155, %155 : vector<16x64xf32>
    %cst_83 = arith.constant dense<0.000000e+00> : vector<16xf32>
    %157 = vector.multi_reduction <add>, %156, %cst_83 [1] : vector<16x64xf32> to vector<16xf32>
    %158 = vector.shape_cast %157 : vector<16xf32> to vector<16x1xf32>
    %cst_84 = arith.constant 6.400000e+01 : f32
    %159 = vector.broadcast %cst_84 : f32 to vector<16x1xf32>
    %160 = arith.divf %158, %159 : vector<16x1xf32>
    %161 = vector.broadcast %153 : vector<16x1xf32> to vector<16x64xf32>
    %162 = arith.subf %145, %161 : vector<16x64xf32>
    %cst_85 = arith.constant 9.99999974E-6 : f32
    %163 = vector.broadcast %cst_85 : f32 to vector<16x1xf32>
    %164 = arith.addf %160, %163 : vector<16x1xf32>
    %165 = math.rsqrt %164 : vector<16x1xf32>
    %166 = vector.broadcast %165 : vector<16x1xf32> to vector<16x64xf32>
    %167 = arith.mulf %162, %166 : vector<16x64xf32>
    %168 = vector.broadcast %147 : vector<1x64xf32> to vector<16x64xf32>
    %169 = arith.mulf %167, %168 : vector<16x64xf32>
    %170 = vector.broadcast %149 : vector<1x64xf32> to vector<16x64xf32>
    %171 = arith.addf %169, %170 : vector<16x64xf32>
    %172 = arith.truncf %171 : vector<16x64xf32> to vector<16x64xbf16>
    %c2_86 = arith.constant 2 : index
    %c0_87 = arith.constant 0 : index
    %c0_88 = arith.constant 0 : index
    %173 = vector.load %arg12[%c2_86, %c0_87, %c0_88] : memref<4x64x256xbf16, #tpu.memory_space<vmem>>, vector<1x64x256xbf16>
    %174 = vector.shape_cast %173 : vector<1x64x256xbf16> to vector<64x256xbf16>
    %cst_89 = arith.constant dense<0.000000e+00> : vector<16x256xf32>
    %175 = tpu.matmul %172, %174, %cst_89 {dimension_numbers = #tpu.dot_dimension_numbers<[1], [0], [0], [1], [0, 0, 1, 1], [], []>} : vector<16x64xbf16>, vector<64x256xbf16>, vector<16x256xf32> -> vector<16x256xf32>
    %c2_90 = arith.constant 2 : index
    %c0_91 = arith.constant 0 : index
    %c0_92 = arith.constant 0 : index
    %176 = vector.load %arg13[%c2_90, %c0_91, %c0_92] : memref<4x1x256xf32, #tpu.memory_space<vmem>>, vector<1x1x256xf32>
    %177 = vector.shape_cast %176 : vector<1x1x256xf32> to vector<1x256xf32>
    %178 = vector.broadcast %177 : vector<1x256xf32> to vector<16x256xf32>
    %179 = arith.addf %175, %178 : vector<16x256xf32>
    %180 = arith.negf %179 : vector<16x256xf32>
    %181 = math.exp %180 : vector<16x256xf32>
    %cst_93 = arith.constant 1.000000e+00 : f32
    %182 = vector.broadcast %cst_93 : f32 to vector<16x256xf32>
    %183 = arith.addf %182, %181 : vector<16x256xf32>
    %184 = arith.divf %182, %183 : vector<16x256xf32>
    %185 = arith.mulf %179, %184 : vector<16x256xf32>
    %186 = arith.truncf %185 : vector<16x256xf32> to vector<16x256xbf16>
    %c2_94 = arith.constant 2 : index
    %c0_95 = arith.constant 0 : index
    %c0_96 = arith.constant 0 : index
    %187 = vector.load %arg14[%c2_94, %c0_95, %c0_96] : memref<4x256x64xbf16, #tpu.memory_space<vmem>>, vector<1x256x64xbf16>
    %188 = vector.shape_cast %187 : vector<1x256x64xbf16> to vector<256x64xbf16>
    %cst_97 = arith.constant dense<0.000000e+00> : vector<16x64xf32>
    %189 = tpu.matmul %186, %188, %cst_97 {dimension_numbers = #tpu.dot_dimension_numbers<[1], [0], [0], [1], [0, 0, 1, 1], [], []>} : vector<16x256xbf16>, vector<256x64xbf16>, vector<16x64xf32> -> vector<16x64xf32>
    %c2_98 = arith.constant 2 : index
    %c0_99 = arith.constant 0 : index
    %c0_100 = arith.constant 0 : index
    %190 = vector.load %arg15[%c2_98, %c0_99, %c0_100] : memref<4x1x64xf32, #tpu.memory_space<vmem>>, vector<1x1x64xf32>
    %191 = vector.shape_cast %190 : vector<1x1x64xf32> to vector<1x64xf32>
    %192 = vector.broadcast %191 : vector<1x64xf32> to vector<16x64xf32>
    %193 = arith.addf %189, %192 : vector<16x64xf32>
    %194 = arith.addf %145, %193 : vector<16x64xf32>
    %c3 = arith.constant 3 : index
    %c0_101 = arith.constant 0 : index
    %c0_102 = arith.constant 0 : index
    %195 = vector.load %arg10[%c3, %c0_101, %c0_102] : memref<4x1x64xf32, #tpu.memory_space<vmem>>, vector<1x1x64xf32>
    %196 = vector.shape_cast %195 : vector<1x1x64xf32> to vector<1x64xf32>
    %c3_103 = arith.constant 3 : index
    %c0_104 = arith.constant 0 : index
    %c0_105 = arith.constant 0 : index
    %197 = vector.load %arg11[%c3_103, %c0_104, %c0_105] : memref<4x1x64xf32, #tpu.memory_space<vmem>>, vector<1x1x64xf32>
    %198 = vector.shape_cast %197 : vector<1x1x64xf32> to vector<1x64xf32>
    %cst_106 = arith.constant dense<0.000000e+00> : vector<16xf32>
    %199 = vector.multi_reduction <add>, %194, %cst_106 [1] : vector<16x64xf32> to vector<16xf32>
    %200 = vector.shape_cast %199 : vector<16xf32> to vector<16x1xf32>
    %cst_107 = arith.constant 6.400000e+01 : f32
    %201 = vector.broadcast %cst_107 : f32 to vector<16x1xf32>
    %202 = arith.divf %200, %201 : vector<16x1xf32>
    %203 = vector.broadcast %202 : vector<16x1xf32> to vector<16x64xf32>
    %204 = arith.subf %194, %203 : vector<16x64xf32>
    %205 = arith.mulf %204, %204 : vector<16x64xf32>
    %cst_108 = arith.constant dense<0.000000e+00> : vector<16xf32>
    %206 = vector.multi_reduction <add>, %205, %cst_108 [1] : vector<16x64xf32> to vector<16xf32>
    %207 = vector.shape_cast %206 : vector<16xf32> to vector<16x1xf32>
    %cst_109 = arith.constant 6.400000e+01 : f32
    %208 = vector.broadcast %cst_109 : f32 to vector<16x1xf32>
    %209 = arith.divf %207, %208 : vector<16x1xf32>
    %210 = vector.broadcast %202 : vector<16x1xf32> to vector<16x64xf32>
    %211 = arith.subf %194, %210 : vector<16x64xf32>
    %cst_110 = arith.constant 9.99999974E-6 : f32
    %212 = vector.broadcast %cst_110 : f32 to vector<16x1xf32>
    %213 = arith.addf %209, %212 : vector<16x1xf32>
    %214 = math.rsqrt %213 : vector<16x1xf32>
    %215 = vector.broadcast %214 : vector<16x1xf32> to vector<16x64xf32>
    %216 = arith.mulf %211, %215 : vector<16x64xf32>
    %217 = vector.broadcast %196 : vector<1x64xf32> to vector<16x64xf32>
    %218 = arith.mulf %216, %217 : vector<16x64xf32>
    %219 = vector.broadcast %198 : vector<1x64xf32> to vector<16x64xf32>
    %220 = arith.addf %218, %219 : vector<16x64xf32>
    %221 = arith.truncf %220 : vector<16x64xf32> to vector<16x64xbf16>
    %c3_111 = arith.constant 3 : index
    %c0_112 = arith.constant 0 : index
    %c0_113 = arith.constant 0 : index
    %222 = vector.load %arg12[%c3_111, %c0_112, %c0_113] : memref<4x64x256xbf16, #tpu.memory_space<vmem>>, vector<1x64x256xbf16>
    %223 = vector.shape_cast %222 : vector<1x64x256xbf16> to vector<64x256xbf16>
    %cst_114 = arith.constant dense<0.000000e+00> : vector<16x256xf32>
    %224 = tpu.matmul %221, %223, %cst_114 {dimension_numbers = #tpu.dot_dimension_numbers<[1], [0], [0], [1], [0, 0, 1, 1], [], []>} : vector<16x64xbf16>, vector<64x256xbf16>, vector<16x256xf32> -> vector<16x256xf32>
    %c3_115 = arith.constant 3 : index
    %c0_116 = arith.constant 0 : index
    %c0_117 = arith.constant 0 : index
    %225 = vector.load %arg13[%c3_115, %c0_116, %c0_117] : memref<4x1x256xf32, #tpu.memory_space<vmem>>, vector<1x1x256xf32>
    %226 = vector.shape_cast %225 : vector<1x1x256xf32> to vector<1x256xf32>
    %227 = vector.broadcast %226 : vector<1x256xf32> to vector<16x256xf32>
    %228 = arith.addf %224, %227 : vector<16x256xf32>
    %229 = arith.negf %228 : vector<16x256xf32>
    %230 = math.exp %229 : vector<16x256xf32>
    %cst_118 = arith.constant 1.000000e+00 : f32
    %231 = vector.broadcast %cst_118 : f32 to vector<16x256xf32>
    %232 = arith.addf %231, %230 : vector<16x256xf32>
    %233 = arith.divf %231, %232 : vector<16x256xf32>
    %234 = arith.mulf %228, %233 : vector<16x256xf32>
    %235 = arith.truncf %234 : vector<16x256xf32> to vector<16x256xbf16>
    %c3_119 = arith.constant 3 : index
    %c0_120 = arith.constant 0 : index
    %c0_121 = arith.constant 0 : index
    %236 = vector.load %arg14[%c3_119, %c0_120, %c0_121] : memref<4x256x64xbf16, #tpu.memory_space<vmem>>, vector<1x256x64xbf16>
    %237 = vector.shape_cast %236 : vector<1x256x64xbf16> to vector<256x64xbf16>
    %cst_122 = arith.constant dense<0.000000e+00> : vector<16x64xf32>
    %238 = tpu.matmul %235, %237, %cst_122 {dimension_numbers = #tpu.dot_dimension_numbers<[1], [0], [0], [1], [0, 0, 1, 1], [], []>} : vector<16x256xbf16>, vector<256x64xbf16>, vector<16x64xf32> -> vector<16x64xf32>
    %c3_123 = arith.constant 3 : index
    %c0_124 = arith.constant 0 : index
    %c0_125 = arith.constant 0 : index
    %239 = vector.load %arg15[%c3_123, %c0_124, %c0_125] : memref<4x1x64xf32, #tpu.memory_space<vmem>>, vector<1x1x64xf32>
    %240 = vector.shape_cast %239 : vector<1x1x64xf32> to vector<1x64xf32>
    %241 = vector.broadcast %240 : vector<1x64xf32> to vector<16x64xf32>
    %242 = arith.addf %238, %241 : vector<16x64xf32>
    %243 = arith.addf %194, %242 : vector<16x64xf32>
    %244 = arith.negf %243 : vector<16x64xf32>
    %245 = math.exp %244 : vector<16x64xf32>
    %cst_126 = arith.constant 1.000000e+00 : f32
    %246 = vector.broadcast %cst_126 : f32 to vector<16x64xf32>
    %247 = arith.addf %246, %245 : vector<16x64xf32>
    %248 = arith.divf %246, %247 : vector<16x64xf32>
    %249 = arith.mulf %243, %248 : vector<16x64xf32>
    %250 = arith.truncf %249 : vector<16x64xf32> to vector<16x64xbf16>
    %c0_127 = arith.constant 0 : index
    %c0_128 = arith.constant 0 : index
    %251 = vector.load %arg16[%c0_127, %c0_128] : memref<64x16xbf16, #tpu.memory_space<vmem>>, vector<64x16xbf16>
    %cst_129 = arith.constant dense<0.000000e+00> : vector<16x16xf32>
    %252 = tpu.matmul %250, %251, %cst_129 {dimension_numbers = #tpu.dot_dimension_numbers<[1], [0], [0], [1], [0, 0, 1, 1], [], []>} : vector<16x64xbf16>, vector<64x16xbf16>, vector<16x16xf32> -> vector<16x16xf32>
    %c0_130 = arith.constant 0 : index
    %c0_131 = arith.constant 0 : index
    %253 = vector.load %arg17[%c0_130, %c0_131] : memref<1x16xf32, #tpu.memory_space<vmem>>, vector<1x16xf32>
    %254 = vector.broadcast %253 : vector<1x16xf32> to vector<16x16xf32>
    %255 = arith.addf %252, %254 : vector<16x16xf32>
    %c0_132 = arith.constant 0 : index
    %c0_133 = arith.constant 0 : index
    %256 = vector.load %arg18[%c0_132, %c0_133] : memref<16x16xf32, #tpu.memory_space<vmem>>, vector<16x16xf32>
    tpu.vector_store %arg18[%c0_132, %c0_133], %255 {strides = array<i32>} : memref<16x16xf32, #tpu.memory_space<vmem>>, vector<16x16xf32>,
    return
  }
  func.func @transform_0(%arg0: i32) -> (i32, i32) {
    %c0_i32 = arith.constant 0 : i32
    %c0_i32_0 = arith.constant 0 : i32
    return %arg0, %c0_i32 : i32, i32
  }
  func.func @transform_1(%arg0: i32) -> (i32, i32) {
    %c0_i32 = arith.constant 0 : i32
    %c0_i32_0 = arith.constant 0 : i32
    return %arg0, %c0_i32 : i32, i32
  }
  func.func @transform_2(%arg0: i32) -> (i32, i32) {
    %c0_i32 = arith.constant 0 : i32
    %c0_i32_0 = arith.constant 0 : i32
    %c0_i32_1 = arith.constant 0 : i32
    return %c0_i32, %c0_i32_0 : i32, i32
  }
  func.func @transform_3(%arg0: i32) -> (i32, i32) {
    %c0_i32 = arith.constant 0 : i32
    %c0_i32_0 = arith.constant 0 : i32
    %c0_i32_1 = arith.constant 0 : i32
    return %c0_i32, %c0_i32_0 : i32, i32
  }
  func.func @transform_4(%arg0: i32) -> (i32, i32) {
    %c0_i32 = arith.constant 0 : i32
    %c0_i32_0 = arith.constant 0 : i32
    %c0_i32_1 = arith.constant 0 : i32
    return %c0_i32, %c0_i32_0 : i32, i32
  }
  func.func @transform_5(%arg0: i32) -> (i32, i32) {
    %c0_i32 = arith.constant 0 : i32
    %c0_i32_0 = arith.constant 0 : i32
    %c0_i32_1 = arith.constant 0 : i32
    return %c0_i32, %c0_i32_0 : i32, i32
  }
  func.func @transform_6(%arg0: i32) -> (i32, i32) {
    %c0_i32 = arith.constant 0 : i32
    %c0_i32_0 = arith.constant 0 : i32
    %c0_i32_1 = arith.constant 0 : i32
    return %c0_i32, %c0_i32_0 : i32, i32
  }
  func.func @transform_7(%arg0: i32) -> (i32, i32) {
    %c0_i32 = arith.constant 0 : i32
    %c0_i32_0 = arith.constant 0 : i32
    %c0_i32_1 = arith.constant 0 : i32
    return %c0_i32, %c0_i32_0 : i32, i32
  }
  func.func @transform_8(%arg0: i32) -> (i32, i32) {
    %c0_i32 = arith.constant 0 : i32
    %c0_i32_0 = arith.constant 0 : i32
    %c0_i32_1 = arith.constant 0 : i32
    return %c0_i32, %c0_i32_0 : i32, i32
  }
  func.func @transform_9(%arg0: i32) -> (i32, i32, i32) {
    %c0_i32 = arith.constant 0 : i32
    %c0_i32_0 = arith.constant 0 : i32
    %c0_i32_1 = arith.constant 0 : i32
    %c0_i32_2 = arith.constant 0 : i32
    return %c0_i32, %c0_i32_0, %c0_i32_1 : i32, i32, i32
  }
  func.func @transform_10(%arg0: i32) -> (i32, i32, i32) {
    %c0_i32 = arith.constant 0 : i32
    %c0_i32_0 = arith.constant 0 : i32
    %c0_i32_1 = arith.constant 0 : i32
    %c0_i32_2 = arith.constant 0 : i32
    return %c0_i32, %c0_i32_0, %c0_i32_1 : i32, i32, i32
  }
  func.func @transform_11(%arg0: i32) -> (i32, i32, i32) {
    %c0_i32 = arith.constant 0 : i32
    %c0_i32_0 = arith.constant 0 : i32
    %c0_i32_1 = arith.constant 0 : i32
    %c0_i32_2 = arith.constant 0 : i32
    return %c0_i32, %c0_i32_0, %c0_i32_1 : i32, i32, i32
  }
  func.func @transform_12(%arg0: i32) -> (i32, i32, i32) {
    %c0_i32 = arith.constant 0 : i32
    %c0_i32_0 = arith.constant 0 : i32
    %c0_i32_1 = arith.constant 0 : i32
    %c0_i32_2 = arith.constant 0 : i32
    return %c0_i32, %c0_i32_0, %c0_i32_1 : i32, i32, i32
  }
  func.func @transform_13(%arg0: i32) -> (i32, i32, i32) {
    %c0_i32 = arith.constant 0 : i32
    %c0_i32_0 = arith.constant 0 : i32
    %c0_i32_1 = arith.constant 0 : i32
    %c0_i32_2 = arith.constant 0 : i32
    return %c0_i32, %c0_i32_0, %c0_i32_1 : i32, i32, i32
  }
  func.func @transform_14(%arg0: i32) -> (i32, i32, i32) {
    %c0_i32 = arith.constant 0 : i32
    %c0_i32_0 = arith.constant 0 : i32
    %c0_i32_1 = arith.constant 0 : i32
    %c0_i32_2 = arith.constant 0 : i32
    return %c0_i32, %c0_i32_0, %c0_i32_1 : i32, i32, i32
  }
  func.func @transform_15(%arg0: i32) -> (i32, i32) {
    %c0_i32 = arith.constant 0 : i32
    %c0_i32_0 = arith.constant 0 : i32
    %c0_i32_1 = arith.constant 0 : i32
    return %c0_i32, %c0_i32_0 : i32, i32
  }
  func.func @transform_16(%arg0: i32) -> (i32, i32) {
    %c0_i32 = arith.constant 0 : i32
    %c0_i32_0 = arith.constant 0 : i32
    %c0_i32_1 = arith.constant 0 : i32
    return %c0_i32, %c0_i32_0 : i32, i32
  }
  func.func @transform_17(%arg0: i32) -> (i32, i32) {
    %c0_i32 = arith.constant 0 : i32
    %c0_i32_0 = arith.constant 0 : i32
    return %arg0, %c0_i32 : i32, i32
  }
}

</mosaic_0001>

<llo_original>
// kernel: tpu_custom_call.1
$region0: #{tpu_custom_call.1}
  #allocation0 [shape = 'u32[]', space=smem, size = 0x4, offset = 0x4, fixed_abs, tag = 'smem constant byte address 0x4 - core index']
  #allocation1 [shape = 'u32[144,128]{1,0:T(1,128)}', space=vmem, size = 0x12000, scoped, tag = 'internal scratch']
  %s0 = inlined_call_operand.vmem [shape: f32[16,1], index: 0, kind: input, shape index: {}]
  %s1 = inlined_call_operand.vmem [shape: bf16[16,48], index: 1, kind: input, shape index: {}]
  %s2 = inlined_call_operand.vmem [shape: f32[1,16], index: 2, kind: input, shape index: {}]
  %s3 = inlined_call_operand.vmem [shape: bf16[32,128], index: 3, kind: input, shape index: {}]
  %s4 = inlined_call_operand.vmem [shape: f32[1,128], index: 4, kind: input, shape index: {}]
  %s5 = inlined_call_operand.vmem [shape: bf16[128,32], index: 5, kind: input, shape index: {}]
  %s6 = inlined_call_operand.vmem [shape: f32[1,32], index: 6, kind: input, shape index: {}]
  %s7 = inlined_call_operand.vmem [shape: bf16[80,64], index: 7, kind: input, shape index: {}]
  %s8 = inlined_call_operand.vmem [shape: f32[1,64], index: 8, kind: input, shape index: {}]
  %s9 = inlined_call_operand.vmem [shape: f32[4,1,64], index: 9, kind: input, shape index: {}]
  %s10 = inlined_call_operand.vmem [shape: f32[4,1,64], index: 10, kind: input, shape index: {}]
  %s11 = inlined_call_operand.vmem [shape: bf16[4,64,256], index: 11, kind: input, shape index: {}]
  %s12 = inlined_call_operand.vmem [shape: f32[4,1,256], index: 12, kind: input, shape index: {}]
  %s13 = inlined_call_operand.vmem [shape: bf16[4,256,64], index: 13, kind: input, shape index: {}]
  %s14 = inlined_call_operand.vmem [shape: f32[4,1,64], index: 14, kind: input, shape index: {}]
  %s15 = inlined_call_operand.vmem [shape: bf16[64,16], index: 15, kind: input, shape index: {}]
  %s16 = inlined_call_operand.vmem [shape: f32[1,16], index: 16, kind: input, shape index: {}]
  %s17 = inlined_call_operand.hbm [shape: f32[16,16], index: 17, kind: output, shape index: {}]
  %s18 = sld [smem:[#allocation0]]
  $region78: #{tpu_custom_call.1} parent=0
    _
  %s20 = ssub.s32 1, %s18
  %s21 = scalar_select 0, %s20, %s18
  $region1: #{tpu_custom_call.1} parent=0
    #allocation2 [shape = 'u8[8192]{0}', space=vmem, size = 0x2000, scoped, tag = 'output window, operand 0, single buffered']
    #allocation3 [shape = 's32[1]{0}', space=sflag, size = 0x4, scoped, tag = 'scoped memory for tpu_custom_call.1']
    %22 = vsyncpa [#allocation3], 0
    // Predicated region
    $region2: #{tpu_custom_call.1} parent=1 // pred_check
      _
    $region3: #{tpu_custom_call.1} parent=1 // pred_check_branch
      %24 = sbr.rel (0) target = $region5
    $region4: #{tpu_custom_call.1} parent=1 // pred_region
      _
    $region5: #{tpu_custom_call.1} parent=1 // pred_fallthru
      _
    // Predicated region
    $region6: #{tpu_custom_call.1} parent=1 // pred_check
      _
    $region7: #{tpu_custom_call.1} parent=1 // pred_check_branch
      %26 = sbr.rel (0) target = $region9
    $region8: #{tpu_custom_call.1} parent=1 // pred_region
      _
    $region9: #{tpu_custom_call.1} parent=1 // pred_fallthru
      _
    // Predicated region
    $region10: #{tpu_custom_call.1} parent=1 // pred_check
      _
    $region11: #{tpu_custom_call.1} parent=1 // pred_check_branch
      %28 = sbr.rel (0) target = $region13
    $region12: #{tpu_custom_call.1} parent=1 // pred_region
      _
    $region13: #{tpu_custom_call.1} parent=1 // pred_fallthru
      _
    // Predicated region
    $region14: #{tpu_custom_call.1} parent=1 // pred_check
      _
    $region15: #{tpu_custom_call.1} parent=1 // pred_check_branch
      %30 = sbr.rel (0) target = $region17
    $region16: #{tpu_custom_call.1} parent=1 // pred_region
      _
    $region17: #{tpu_custom_call.1} parent=1 // pred_fallthru
      _
    // Predicated region
    $region18: #{tpu_custom_call.1} parent=1 // pred_check
      _
    $region19: #{tpu_custom_call.1} parent=1 // pred_check_branch
      %32 = sbr.rel (0) target = $region21
    $region20: #{tpu_custom_call.1} parent=1 // pred_region
      _
    $region21: #{tpu_custom_call.1} parent=1 // pred_fallthru
      _
    // Predicated region
    $region22: #{tpu_custom_call.1} parent=1 // pred_check
      _
    $region23: #{tpu_custom_call.1} parent=1 // pred_check_branch
      %34 = sbr.rel (0) target = $region25
    $region24: #{tpu_custom_call.1} parent=1 // pred_region
      _
    $region25: #{tpu_custom_call.1} parent=1 // pred_fallthru
      _
    // Predicated region
    $region26: #{tpu_custom_call.1} parent=1 // pred_check
      _
    $region27: #{tpu_custom_call.1} parent=1 // pred_check_branch
      %36 = sbr.rel (0) target = $region29
    $region28: #{tpu_custom_call.1} parent=1 // pred_region
      _
    $region29: #{tpu_custom_call.1} parent=1 // pred_fallthru
      _
    // Predicated region
    $region30: #{tpu_custom_call.1} parent=1 // pred_check
      _
    $region31: #{tpu_custom_call.1} parent=1 // pred_check_branch
      %38 = sbr.rel (0) target = $region33
    $region32: #{tpu_custom_call.1} parent=1 // pred_region
      _
    $region33: #{tpu_custom_call.1} parent=1 // pred_fallthru
      _
    // Predicated region
    $region34: #{tpu_custom_call.1} parent=1 // pred_check
      _
    $region35: #{tpu_custom_call.1} parent=1 // pred_check_branch
      %40 = sbr.rel (0) target = $region37
    $region36: #{tpu_custom_call.1} parent=1 // pred_region
      _
    $region37: #{tpu_custom_call.1} parent=1 // pred_fallthru
      _
    // Predicated region
    $region38: #{tpu_custom_call.1} parent=1 // pred_check
      _
    $region39: #{tpu_custom_call.1} parent=1 // pred_check_branch
      %42 = sbr.rel (0) target = $region41
    $region40: #{tpu_custom_call.1} parent=1 // pred_region
      _
    $region41: #{tpu_custom_call.1} parent=1 // pred_fallthru
      _
    // Predicated region
    $region42: #{tpu_custom_call.1} parent=1 // pred_check
      _
    $region43: #{tpu_custom_call.1} parent=1 // pred_check_branch
      %44 = sbr.rel (0) target = $region45
    $region44: #{tpu_custom_call.1} parent=1 // pred_region
      _
    $region45: #{tpu_custom_call.1} parent=1 // pred_fallthru
      _
    // Predicated region
    $region46: #{tpu_custom_call.1} parent=1 // pred_check
      _
    $region47: #{tpu_custom_call.1} parent=1 // pred_check_branch
      %46 = sbr.rel (0) target = $region49
    $region48: #{tpu_custom_call.1} parent=1 // pred_region
      _
    $region49: #{tpu_custom_call.1} parent=1 // pred_fallthru
      _
    // Predicated region
    $region50: #{tpu_custom_call.1} parent=1 // pred_check
      _
    $region51: #{tpu_custom_call.1} parent=1 // pred_check_branch
      %48 = sbr.rel (0) target = $region53
    $region52: #{tpu_custom_call.1} parent=1 // pred_region
      _
    $region53: #{tpu_custom_call.1} parent=1 // pred_fallthru
      _
    // Predicated region
    $region54: #{tpu_custom_call.1} parent=1 // pred_check
      _
    $region55: #{tpu_custom_call.1} parent=1 // pred_check_branch
      %50 = sbr.rel (0) target = $region57
    $region56: #{tpu_custom_call.1} parent=1 // pred_region
      _
    $region57: #{tpu_custom_call.1} parent=1 // pred_fallthru
      _
    // Predicated region
    $region58: #{tpu_custom_call.1} parent=1 // pred_check
      _
    $region59: #{tpu_custom_call.1} parent=1 // pred_check_branch
      %52 = sbr.rel (0) target = $region61
    $region60: #{tpu_custom_call.1} parent=1 // pred_region
      _
    $region61: #{tpu_custom_call.1} parent=1 // pred_fallthru
      _
    // Predicated region
    $region62: #{tpu_custom_call.1} parent=1 // pred_check
      _
    $region63: #{tpu_custom_call.1} parent=1 // pred_check_branch
      %54 = sbr.rel (0) target = $region65
    $region64: #{tpu_custom_call.1} parent=1 // pred_region
      _
    $region65: #{tpu_custom_call.1} parent=1 // pred_fallthru
      _
    // Predicated region
    $region66: #{tpu_custom_call.1} parent=1 // pred_check
      _
    $region67: #{tpu_custom_call.1} parent=1 // pred_check_branch
      %56 = sbr.rel (0) target = $region69
    $region68: #{tpu_custom_call.1} parent=1 // pred_region
      _
    $region69: #{tpu_custom_call.1} parent=1 // pred_fallthru
      _
    %v58 = vld [vmem:[%s0] sm:$0xff]
    %v59 = vld [vmem:[%s0 + $0x8] sm:$0xff]
    %v60 = vld [vmem:[%s2] sm:$0x1]
    %62 = vset.pattern.permute.xlu0 0
    %63 = vperm.xlu0 %62, %v58
    %v64 = vpop.permute.xlu0 %63
    %67 = vset.pattern.permute.xlu0 0
    %68 = vperm.xlu0 %67, %v59
    %v69 = vpop.permute.xlu0 %68
    %v72 = vlaneseq
    %v73 = vshrl.u32 %v72, 7
    %v74 = vsub.s32 0, %v73
    %v75 = vrot.slane %v60, %v74
    %v77 = vmul.f32 %v64, %v75
    %v78 = vmul.f32 %v69, %v75
    %v79 = vand.u32 2147483647, %v77
    %vm80 = vcmp.le.f32.partialorder %v79, 0.7853982
    %vm81 = vcmp.lt.s32.totalorder %v77, 0
    %v82 = vand.u32 %v77, 2139095040
    %v83 = vshrl.u32 %v82, 23
    %v84 = vsub.s32 %v83, 127
    %v85 = vand.u32 2147483647, %v77
    %v86 = vand.u32 %v85, 8388607
    %v87 = vor.u32 %v86, 8388608
    %v88 = vsub.s32 0, %v87
    %v89 = vadd.s32 %v84, 1
    %vm90 = vcmp.gt.s32.totalorder %v89, 0
    %v91 = vsel %vm90, %v89, 0
    %v92 = vshrl.u32 %v91, 5
    %v93 = vand.u32 %v91, 31
    %v94 = vsub.s32 32, %v93
    %v95 = vshrl.u32 683565275, %v94
    %v96 = vshll.u32 683565275, %v93
    %v97 = vshrl.u32 2475754826, %v94
    %v98 = vor.u32 %v96, %v97
    %v99 = vshll.u32 2475754826, %v93
    %v100 = vshrl.u32 2131351028, %v94
    %v101 = vor.u32 %v99, %v100
    %v102 = vshll.u32 2131351028, %v93
    %v103 = vshrl.u32 2102212464, %v94
    %v104 = vor.u32 %v102, %v103
    %v105 = vshll.u32 2102212464, %v93
    %v106 = vshrl.u32 920167782, %v94
    %v107 = vor.u32 %v105, %v106
    %v108 = vshll.u32 920167782, %v93
    %v109 = vshrl.u32 1326507024, %v94
    %v110 = vor.u32 %v108, %v109
    %vm111 = vcmp.lt.s32.totalorder %v92, 1
    %vm112 = vcmp.lt.s32.totalorder %v92, 2
    %vm113 = vcmp.lt.s32.totalorder %v92, 3
    %vm114 = vcmp.lt.s32.totalorder %v92, 4
    %v115 = vsel %vm111, %v95, %v98
    %v116 = vsel %vm114, %v104, 2102212464
    %v117 = vsel %vm113, %v101, %v116
    %v118 = vsel %vm112, %v115, %v117
    %v119 = vsel %vm111, %v98, %v101
    %v120 = vsel %vm114, %v107, 920167782
    %v121 = vsel %vm113, %v104, %v120
    %v122 = vsel %vm112, %v119, %v121
    %v123 = vsel %vm111, %v101, %v104
    %v124 = vsel %vm114, %v110, 1326507024
    %v125 = vsel %vm113, %v107, %v124
    %v126 = vsel %vm112, %v123, %v125
    %v127 = vshll.u32 %v87, 8
    %v128 = vmul.u32.u64.compose %v127, %v126
    %v129 = vextract.low.u32 %v128
    %v130 = vextract.high.u32 %v128
    %v131 = vmul.u32.u64.compose %v127, %v122
    %v132 = vextract.low.u32 %v131
    %v133 = vextract.high.u32 %v131
    %v134 = vmul.u32 %v127, %v118
    %v135 = vadd.s32 %v130, %v132
    %vm136 = vc.u32 %v130, %v132
    %v137 = vadd.s32 %v133, 1
    %v138 = vsel %vm136, %v137, %v133
    %v139 = vadd.s32 %v134, %v138
    %v140 = vadd.s32 %v139, 536870912
    %v141 = vshrl.u32 %v140, 30
    %v142 = vshll.u32 %v141, 30
    %v143 = vsub.s32 %v139, %v142
    %vm144 = vcmp.lt.s32.totalorder %v143, 0
    %v145 = vsub.s32 0, %v143
    %v146 = vsel %vm144, %v145, %v143
    %v147 = vclz %v146
    %v148 = vsub.s32 %v147, 2
    %vm149 = vcmp.gt.s32.totalorder 0, %v148
    %v150 = vsel %vm149, 0, %v148
    %v151 = vsub.s32 32, %v150
    %v152 = vshll.u32 %v143, %v150
    %v153 = vshrl.u32 %v135, %v151
    %v154 = vor.u32 %v152, %v153
    %v155 = vsub.s32 4294967266, %v150
    %v156 = vadd.s32 %v155, 127
    %v157 = vshll.u32 %v156, 23
    %v158 = vor.u32 4788187, %v157
    %v159 = vand.u32 2147483647, %v158
    %v161 = vcvt.s32.f32 %v154
    %v162 = vmul.f32 %v161, %v159
    %v163 = vxor.u32 %v162, 2147483648
    %v164 = vsel %vm81, %v163, %v162
    %v165 = vsub.s32 4, %v141
    %v166 = vsel %vm81, %v165, %v141
    %v167 = vsel %vm80, %v77, %v164
    %v168 = vsel %vm80, 0, %v166
    %v169 = vcosq.f32.pop %v167
    %v170 = vsinq.f32.pop %v167
    %vm171 = vweird.f32 %v77
    %v172 = vadd.s32 %v168, 3
    %v173 = vand.u32 %v172, 3
    %vm174 = vcmp.lt.s32.totalorder %v173, 2
    %vm175 = vcmp.eq.s32.totalorder %v173, 0
    %v176 = vxor.u32 %v170, 2147483648
    %v177 = vsel %vm175, %v169, %v176
    %vm178 = vcmp.eq.s32.totalorder %v173, 2
    %v179 = vxor.u32 %v169, 2147483648
    %v180 = vsel %vm178, %v179, %v170
    %v181 = vsel %vm174, %v177, %v180
    %v182 = vsel %vm171, nan, %v181
    %v183 = vand.u32 2147483647, %v78
    %vm184 = vcmp.le.f32.partialorder %v183, 0.7853982
    %vm185 = vcmp.lt.s32.totalorder %v78, 0
    %v186 = vand.u32 %v78, 2139095040
    %v187 = vshrl.u32 %v186, 23
    %v188 = vsub.s32 %v187, 127
    %v189 = vand.u32 2147483647, %v78
    %v190 = vand.u32 %v189, 8388607
    %v191 = vor.u32 %v190, 8388608
    %v192 = vsub.s32 0, %v191
    %v193 = vadd.s32 %v188, 1
    %vm194 = vcmp.gt.s32.totalorder %v193, 0
    %v195 = vsel %vm194, %v193, 0
    %v196 = vshrl.u32 %v195, 5
    %v197 = vand.u32 %v195, 31
    %v198 = vsub.s32 32, %v197
    %v199 = vshrl.u32 683565275, %v198
    %v200 = vshll.u32 683565275, %v197
    %v201 = vshrl.u32 2475754826, %v198
    %v202 = vor.u32 %v200, %v201
    %v203 = vshll.u32 2475754826, %v197
    %v204 = vshrl.u32 2131351028, %v198
    %v205 = vor.u32 %v203, %v204
    %v206 = vshll.u32 2131351028, %v197
    %v207 = vshrl.u32 2102212464, %v198
    %v208 = vor.u32 %v206, %v207
    %v209 = vshll.u32 2102212464, %v197
    %v210 = vshrl.u32 920167782, %v198
    %v211 = vor.u32 %v209, %v210
    %v212 = vshll.u32 920167782, %v197
    %v213 = vshrl.u32 1326507024, %v198
    %v214 = vor.u32 %v212, %v213
    %vm215 = vcmp.lt.s32.totalorder %v196, 1
    %vm216 = vcmp.lt.s32.totalorder %v196, 2
    %vm217 = vcmp.lt.s32.totalorder %v196, 3
    %vm218 = vcmp.lt.s32.totalorder %v196, 4
    %v219 = vsel %vm215, %v199, %v202
    %v220 = vsel %vm218, %v208, 2102212464
    %v221 = vsel %vm217, %v205, %v220
    %v222 = vsel %vm216, %v219, %v221
    %v223 = vsel %vm215, %v202, %v205
    %v224 = vsel %vm218, %v211, 920167782
    %v225 = vsel %vm217, %v208, %v224
    %v226 = vsel %vm216, %v223, %v225
    %v227 = vsel %vm215, %v205, %v208
    %v228 = vsel %vm218, %v214, 1326507024
    %v229 = vsel %vm217, %v211, %v228
    %v230 = vsel %vm216, %v227, %v229
    %v231 = vshll.u32 %v191, 8
    %v232 = vmul.u32.u64.compose %v231, %v230
    %v233 = vextract.low.u32 %v232
    %v234 = vextract.high.u32 %v232
    %v235 = vmul.u32.u64.compose %v231, %v226
    %v236 = vextract.low.u32 %v235
    %v237 = vextract.high.u32 %v235
    %v238 = vmul.u32 %v231, %v222
    %v239 = vadd.s32 %v234, %v236
    %vm240 = vc.u32 %v234, %v236
    %v241 = vadd.s32 %v237, 1
    %v242 = vsel %vm240, %v241, %v237
    %v243 = vadd.s32 %v238, %v242
    %v244 = vadd.s32 %v243, 536870912
    %v245 = vshrl.u32 %v244, 30
    %v246 = vshll.u32 %v245, 30
    %v247 = vsub.s32 %v243, %v246
    %vm248 = vcmp.lt.s32.totalorder %v247, 0
    %v249 = vsub.s32 0, %v247
    %v250 = vsel %vm248, %v249, %v247
    %v251 = vclz %v250
    %v252 = vsub.s32 %v251, 2
    %vm253 = vcmp.gt.s32.totalorder 0, %v252
    %v254 = vsel %vm253, 0, %v252
    %v255 = vsub.s32 32, %v254
    %v256 = vshll.u32 %v247, %v254
    %v257 = vshrl.u32 %v239, %v255
    %v258 = vor.u32 %v256, %v257
    %v259 = vsub.s32 4294967266, %v254
    %v260 = vadd.s32 %v259, 127
    %v261 = vshll.u32 %v260, 23
    %v262 = vor.u32 4788187, %v261
    %v263 = vand.u32 2147483647, %v262
    %v265 = vcvt.s32.f32 %v258
    %v266 = vmul.f32 %v265, %v263
    %v267 = vxor.u32 %v266, 2147483648
    %v268 = vsel %vm185, %v267, %v266
    %v269 = vsub.s32 4, %v245
    %v270 = vsel %vm185, %v269, %v245
    %v271 = vsel %vm184, %v78, %v268
    %v272 = vsel %vm184, 0, %v270
    %v273 = vcosq.f32.pop %v271
    %v274 = vsinq.f32.pop %v271
    %vm275 = vweird.f32 %v78
    %v276 = vadd.s32 %v272, 3
    %v277 = vand.u32 %v276, 3
    %vm278 = vcmp.lt.s32.totalorder %v277, 2
    %vm279 = vcmp.eq.s32.totalorder %v277, 0
    %v280 = vxor.u32 %v274, 2147483648
    %v281 = vsel %vm279, %v273, %v280
    %vm282 = vcmp.eq.s32.totalorder %v277, 2
    %v283 = vxor.u32 %v273, 2147483648
    %v284 = vsel %vm282, %v283, %v274
    %v285 = vsel %vm278, %v281, %v284
    %v286 = vsel %vm275, nan, %v285
    %v287 = vpack.c.bf16 %v286, %v182
    %v288 = vand.u32 2147483647, %v77
    %vm289 = vcmp.le.f32.partialorder %v288, 0.7853982
    %vm290 = vcmp.lt.s32.totalorder %v77, 0
    %v291 = vand.u32 %v77, 2139095040
    %v292 = vshrl.u32 %v291, 23
    %v293 = vsub.s32 %v292, 127
    %v294 = vand.u32 2147483647, %v77
    %v295 = vand.u32 %v294, 8388607
    %v296 = vor.u32 %v295, 8388608
    %v297 = vsub.s32 0, %v296
    %v298 = vadd.s32 %v293, 1
    %vm299 = vcmp.gt.s32.totalorder %v298, 0
    %v300 = vsel %vm299, %v298, 0
    %v301 = vshrl.u32 %v300, 5
    %v302 = vand.u32 %v300, 31
    %v303 = vsub.s32 32, %v302
    %v304 = vshrl.u32 683565275, %v303
    %v305 = vshll.u32 683565275, %v302
    %v306 = vshrl.u32 2475754826, %v303
    %v307 = vor.u32 %v305, %v306
    %v308 = vshll.u32 2475754826, %v302
    %v309 = vshrl.u32 2131351028, %v303
    %v310 = vor.u32 %v308, %v309
    %v311 = vshll.u32 2131351028, %v302
    %v312 = vshrl.u32 2102212464, %v303
    %v313 = vor.u32 %v311, %v312
    %v314 = vshll.u32 2102212464, %v302
    %v315 = vshrl.u32 920167782, %v303
    %v316 = vor.u32 %v314, %v315
    %v317 = vshll.u32 920167782, %v302
    %v318 = vshrl.u32 1326507024, %v303
    %v319 = vor.u32 %v317, %v318
    %vm320 = vcmp.lt.s32.totalorder %v301, 1
    %vm321 = vcmp.lt.s32.totalorder %v301, 2
    %vm322 = vcmp.lt.s32.totalorder %v301, 3
    %vm323 = vcmp.lt.s32.totalorder %v301, 4
    %v324 = vsel %vm320, %v304, %v307
    %v325 = vsel %vm323, %v313, 2102212464
    %v326 = vsel %vm322, %v310, %v325
    %v327 = vsel %vm321, %v324, %v326
    %v328 = vsel %vm320, %v307, %v310
    %v329 = vsel %vm323, %v316, 920167782
    %v330 = vsel %vm322, %v313, %v329
    %v331 = vsel %vm321, %v328, %v330
    %v332 = vsel %vm320, %v310, %v313
    %v333 = vsel %vm323, %v319, 1326507024
    %v334 = vsel %vm322, %v316, %v333
    %v335 = vsel %vm321, %v332, %v334
    %v336 = vshll.u32 %v296, 8
    %v337 = vmul.u32.u64.compose %v336, %v335
    %v338 = vextract.low.u32 %v337
    %v339 = vextract.high.u32 %v337
    %v340 = vmul.u32.u64.compose %v336, %v331
    %v341 = vextract.low.u32 %v340
    %v342 = vextract.high.u32 %v340
    %v343 = vmul.u32 %v336, %v327
    %v344 = vadd.s32 %v339, %v341
    %vm345 = vc.u32 %v339, %v341
    %v346 = vadd.s32 %v342, 1
    %v347 = vsel %vm345, %v346, %v342
    %v348 = vadd.s32 %v343, %v347
    %v349 = vadd.s32 %v348, 536870912
    %v350 = vshrl.u32 %v349, 30
    %v351 = vshll.u32 %v350, 30
    %v352 = vsub.s32 %v348, %v351
    %vm353 = vcmp.lt.s32.totalorder %v352, 0
    %v354 = vsub.s32 0, %v352
    %v355 = vsel %vm353, %v354, %v352
    %v356 = vclz %v355
    %v357 = vsub.s32 %v356, 2
    %vm358 = vcmp.gt.s32.totalorder 0, %v357
    %v359 = vsel %vm358, 0, %v357
    %v360 = vsub.s32 32, %v359
    %v361 = vshll.u32 %v352, %v359
    %v362 = vshrl.u32 %v344, %v360
    %v363 = vor.u32 %v361, %v362
    %v364 = vsub.s32 4294967266, %v359
    %v365 = vadd.s32 %v364, 127
    %v366 = vshll.u32 %v365, 23
    %v367 = vor.u32 4788187, %v366
    %v368 = vand.u32 2147483647, %v367
    %v370 = vcvt.s32.f32 %v363
    %v371 = vmul.f32 %v370, %v368
    %v372 = vxor.u32 %v371, 2147483648
    %v373 = vsel %vm290, %v372, %v371
    %v374 = vsub.s32 4, %v350
    %v375 = vsel %vm290, %v374, %v350
    %v376 = vsel %vm289, %v77, %v373
    %v377 = vsel %vm289, 0, %v375
    %v378 = vcosq.f32.pop %v376
    %v379 = vsinq.f32.pop %v376
    %vm380 = vweird.f32 %v77
    %v381 = vand.u32 %v377, 3
    %vm382 = vcmp.lt.s32.totalorder %v381, 2
    %vm383 = vcmp.eq.s32.totalorder %v381, 0
    %v384 = vxor.u32 %v379, 2147483648
    %v385 = vsel %vm383, %v378, %v384
    %vm386 = vcmp.eq.s32.totalorder %v381, 2
    %v387 = vxor.u32 %v378, 2147483648
    %v388 = vsel %vm386, %v387, %v379
    %v389 = vsel %vm382, %v385, %v388
    %v390 = vsel %vm380, nan, %v389
    %v391 = vand.u32 2147483647, %v78
    %vm392 = vcmp.le.f32.partialorder %v391, 0.7853982
    %vm393 = vcmp.lt.s32.totalorder %v78, 0
    %v394 = vand.u32 %v78, 2139095040
    %v395 = vshrl.u32 %v394, 23
    %v396 = vsub.s32 %v395, 127
    %v397 = vand.u32 2147483647, %v78
    %v398 = vand.u32 %v397, 8388607
    %v399 = vor.u32 %v398, 8388608
    %v400 = vsub.s32 0, %v399
    %v401 = vadd.s32 %v396, 1
    %vm402 = vcmp.gt.s32.totalorder %v401, 0
    %v403 = vsel %vm402, %v401, 0
    %v404 = vshrl.u32 %v403, 5
    %v405 = vand.u32 %v403, 31
    %v406 = vsub.s32 32, %v405
    %v407 = vshrl.u32 683565275, %v406
    %v408 = vshll.u32 683565275, %v405
    %v409 = vshrl.u32 2475754826, %v406
    %v410 = vor.u32 %v408, %v409
    %v411 = vshll.u32 2475754826, %v405
    %v412 = vshrl.u32 2131351028, %v406
    %v413 = vor.u32 %v411, %v412
    %v414 = vshll.u32 2131351028, %v405
    %v415 = vshrl.u32 2102212464, %v406
    %v416 = vor.u32 %v414, %v415
    %v417 = vshll.u32 2102212464, %v405
    %v418 = vshrl.u32 920167782, %v406
    %v419 = vor.u32 %v417, %v418
    %v420 = vshll.u32 920167782, %v405
    %v421 = vshrl.u32 1326507024, %v406
    %v422 = vor.u32 %v420, %v421
    %vm423 = vcmp.lt.s32.totalorder %v404, 1
    %vm424 = vcmp.lt.s32.totalorder %v404, 2
    %vm425 = vcmp.lt.s32.totalorder %v404, 3
    %vm426 = vcmp.lt.s32.totalorder %v404, 4
    %v427 = vsel %vm423, %v407, %v410
    %v428 = vsel %vm426, %v416, 2102212464
    %v429 = vsel %vm425, %v413, %v428
    %v430 = vsel %vm424, %v427, %v429
    %v431 = vsel %vm423, %v410, %v413
    %v432 = vsel %vm426, %v419, 920167782
    %v433 = vsel %vm425, %v416, %v432
    %v434 = vsel %vm424, %v431, %v433
    %v435 = vsel %vm423, %v413, %v416
    %v436 = vsel %vm426, %v422, 1326507024
    %v437 = vsel %vm425, %v419, %v436
    %v438 = vsel %vm424, %v435, %v437
    %v439 = vshll.u32 %v399, 8
    %v440 = vmul.u32.u64.compose %v439, %v438
    %v441 = vextract.low.u32 %v440
    %v442 = vextract.high.u32 %v440
    %v443 = vmul.u32.u64.compose %v439, %v434
    %v444 = vextract.low.u32 %v443
    %v445 = vextract.high.u32 %v443
    %v446 = vmul.u32 %v439, %v430
    %v447 = vadd.s32 %v442, %v444
    %vm448 = vc.u32 %v442, %v444
    %v449 = vadd.s32 %v445, 1
    %v450 = vsel %vm448, %v449, %v445
    %v451 = vadd.s32 %v446, %v450
    %v452 = vadd.s32 %v451, 536870912
    %v453 = vshrl.u32 %v452, 30
    %v454 = vshll.u32 %v453, 30
    %v455 = vsub.s32 %v451, %v454
    %vm456 = vcmp.lt.s32.totalorder %v455, 0
    %v457 = vsub.s32 0, %v455
    %v458 = vsel %vm456, %v457, %v455
    %v459 = vclz %v458
    %v460 = vsub.s32 %v459, 2
    %vm461 = vcmp.gt.s32.totalorder 0, %v460
    %v462 = vsel %vm461, 0, %v460
    %v463 = vsub.s32 32, %v462
    %v464 = vshll.u32 %v455, %v462
    %v465 = vshrl.u32 %v447, %v463
    %v466 = vor.u32 %v464, %v465
    %v467 = vsub.s32 4294967266, %v462
    %v468 = vadd.s32 %v467, 127
    %v469 = vshll.u32 %v468, 23
    %v470 = vor.u32 4788187, %v469
    %v471 = vand.u32 2147483647, %v470
    %v473 = vcvt.s32.f32 %v466
    %v474 = vmul.f32 %v473, %v471
    %v475 = vxor.u32 %v474, 2147483648
    %v476 = vsel %vm393, %v475, %v474
    %v477 = vsub.s32 4, %v453
    %v478 = vsel %vm393, %v477, %v453
    %v479 = vsel %vm392, %v78, %v476
    %v480 = vsel %vm392, 0, %v478
    %v481 = vcosq.f32.pop %v479
    %v482 = vsinq.f32.pop %v479
    %vm483 = vweird.f32 %v78
    %v484 = vand.u32 %v480, 3
    %vm485 = vcmp.lt.s32.totalorder %v484, 2
    %vm486 = vcmp.eq.s32.totalorder %v484, 0
    %v487 = vxor.u32 %v482, 2147483648
    %v488 = vsel %vm486, %v481, %v487
    %vm489 = vcmp.eq.s32.totalorder %v484, 2
    %v490 = vxor.u32 %v481, 2147483648
    %v491 = vsel %vm489, %v490, %v482
    %v492 = vsel %vm485, %v488, %v491
    %v493 = vsel %vm483, nan, %v492
    %v494 = vpack.c.bf16 %v493, %v390
    %v495 = vld [vmem:[%s3] sm:$0xf]
    %v496 = vld [vmem:[%s3 + $0x4] sm:$0xf]
    %v497 = vld [vmem:[%s3 + $0x8] sm:$0xf]
    %v498 = vld [vmem:[%s3 + $0xc] sm:$0xf]
    %v501 = vunpack.c.l.b16 %v497
    %v502 = vunpack.c.l.b16 %v498
    %v503 = vpack.c.b16 %v502, %v501
    %vm505 = vcmask 130048
    %v507 = vsel %vm505, %v494, 0
    %509 = vmatprep.subr.bf16.mxu0 0
    %510 = vmatpush1.bf16.msra.mxu0 0
    %511 = vmatprep.subr.bf16.mxu0 0
    %512 = vmatpush1.bf16.msra.mxu0 0
    %513 = vmatprep.subr.bf16.mxu0 0
    %514 = vmatpush1.bf16.msra.mxu0 0
    %515 = vmatprep.subr.bf16.mxu0 0
    %516 = vmatpush1.bf16.msra.mxu0 0
    %517 = vmatprep.subr.bf16.mxu0 0
    %518 = vmatpush1.bf16.msra.mxu0 0
    %519 = vmatprep.subr.bf16.mxu0 0
    %520 = vmatpush1.bf16.msra.mxu0 0
    %521 = vmatprep.subr.bf16.mxu0 0
    %522 = vmatpush1.bf16.msra.mxu0 0
    %523 = vmatprep.subr.bf16.mxu0 0
    %524 = vmatpush1.bf16.msra.mxu0 %v503
    %525 = vmatprep.subr.bf16.mxu0 0
    %526 = vmatpush2.bf16.msra.mxu0 0
    %527 = vmatprep.subr.bf16.mxu0 0
    %528 = vmatpush2.bf16.msra.mxu0 0
    %529 = vmatprep.subr.bf16.mxu0 0
    %530 = vmatpush2.bf16.msra.mxu0 0
    %531 = vmatprep.subr.bf16.mxu0 0
    %532 = vmatpush2.bf16.msra.mxu0 0
    %533 = vmatprep.subr.bf16.mxu0 0
    %534 = vmatpush2.bf16.msra.mxu0 0
    %535 = vmatprep.subr.bf16.mxu0 0
    %536 = vmatpush2.bf16.msra.mxu0 0
    %537 = vmatprep.subr.bf16.mxu0 0
    %538 = vmatpush2.bf16.msra.mxu0 0
    %539 = vmatprep.subr.bf16.mxu0 0
    %540 = vmatpush2.bf16.msra.mxu0 0
    %541 = vmatprep.mubr.bf16.mxu0 0
    %542 = vmatmul.mubr.bf16.gmra.mxu0 %v507
    %v543 = vpop.f32.mrf.mxu0
    %v544 = vadd.f32 0.0, %v543
    %v545 = vpop.f32.mrf.mxu0
    %v546 = vpop.f32.mrf.mxu0
    %v547 = vadd.f32 0.0, %v546
    %v548 = vpop.f32.mrf.mxu0
    %549 = vdwg.mxu0
    %v552 = vunpack.c.l.b16 %v495
    %v553 = vunpack.c.l.b16 %v496
    %v554 = vpack.c.b16 %v553, %v552
    %v557 = vsel %vm505, %v287, 0
    %559 = vmatprep.subr.bf16.mxu0 0
    %560 = vmatpush1.bf16.msra.mxu0 0
    %561 = vmatprep.subr.bf16.mxu0 0
    %562 = vmatpush1.bf16.msra.mxu0 0
    %563 = vmatprep.subr.bf16.mxu0 0
    %564 = vmatpush1.bf16.msra.mxu0 0
    %565 = vmatprep.subr.bf16.mxu0 0
    %566 = vmatpush1.bf16.msra.mxu0 0
    %567 = vmatprep.subr.bf16.mxu0 0
    %568 = vmatpush1.bf16.msra.mxu0 0
    %569 = vmatprep.subr.bf16.mxu0 0
    %570 = vmatpush1.bf16.msra.mxu0 0
    %571 = vmatprep.subr.bf16.mxu0 0
    %572 = vmatpush1.bf16.msra.mxu0 0
    %573 = vmatprep.subr.bf16.mxu0 0
    %574 = vmatpush1.bf16.msra.mxu0 %v554
    %575 = vmatprep.subr.bf16.mxu0 0
    %576 = vmatpush2.bf16.msra.mxu0 0
    %577 = vmatprep.subr.bf16.mxu0 0
    %578 = vmatpush2.bf16.msra.mxu0 0
    %579 = vmatprep.subr.bf16.mxu0 0
    %580 = vmatpush2.bf16.msra.mxu0 0
    %581 = vmatprep.subr.bf16.mxu0 0
    %582 = vmatpush2.bf16.msra.mxu0 0
    %583 = vmatprep.subr.bf16.mxu0 0
    %584 = vmatpush2.bf16.msra.mxu0 0
    %585 = vmatprep.subr.bf16.mxu0 0
    %586 = vmatpush2.bf16.msra.mxu0 0
    %587 = vmatprep.subr.bf16.mxu0 0
    %588 = vmatpush2.bf16.msra.mxu0 0
    %589 = vmatprep.subr.bf16.mxu0 0
    %590 = vmatpush2.bf16.msra.mxu0 0
    %591 = vmatprep.mubr.bf16.mxu0 0
    %592 = vmatmul.mubr.bf16.gmra.mxu0 %v557
    %v593 = vpop.f32.mrf.mxu0
    %v594 = vadd.f32 %v544, %v593
    %v595 = vpop.f32.mrf.mxu0
    %v596 = vpop.f32.mrf.mxu0
    %v597 = vadd.f32 %v547, %v596
    %v598 = vpop.f32.mrf.mxu0
    %599 = vdwg.mxu0
    %v600 = vld [vmem:[%s4] sm:$0x1]
    %v602 = vlaneseq
    %v603 = vshrl.u32 %v602, 7
    %v604 = vsub.s32 0, %v603
    %v605 = vrot.slane %v600, %v604
    %v607 = vadd.f32 %v594, %v605
    %v608 = vadd.f32 %v597, %v605
    %v609 = vmul.f32 %v607, %v607
    %v610 = vmul.f32 %v608, %v608
    %v611 = vmul.f32 %v607, %v609
    %v612 = vmul.f32 %v608, %v610
    %v613 = vmul.f32 %v611, 0.044715
    %v614 = vmul.f32 %v612, 0.044715
    %v615 = vadd.f32 %v607, %v613
    %v616 = vadd.f32 %v608, %v614
    %v617 = vmul.f32 %v615, 0.7978846
    %v618 = vmul.f32 %v616, 0.7978846
    %v619 = vtanh.pop %v617
    %v620 = vtanh.pop %v618
    %v621 = vadd.f32 %v619, 1.0
    %v622 = vadd.f32 %v620, 1.0
    %v623 = vmul.f32 %v621, 0.5
    %v624 = vmul.f32 %v622, 0.5
    %v625 = vmul.f32 %v607, %v623
    %v626 = vmul.f32 %v608, %v624
    %v627 = vpack.c.bf16 %v626, %v625
    %v628 = vld [vmem:[%s5] sm:$0xf]
    %v629 = vld [vmem:[%s5 + $0x4] sm:$0xf]
    %v630 = vld [vmem:[%s5 + $0x8] sm:$0xf]
    %v631 = vld [vmem:[%s5 + $0xc] sm:$0xf]
    %v632 = vld [vmem:[%s5 + $0x10] sm:$0xf]
    %v633 = vld [vmem:[%s5 + $0x14] sm:$0xf]
    %v634 = vld [vmem:[%s5 + $0x18] sm:$0xf]
    %v635 = vld [vmem:[%s5 + $0x1c] sm:$0xf]
    %v636 = vld [vmem:[%s5 + $0x20] sm:$0xf]
    %v637 = vld [vmem:[%s5 + $0x24] sm:$0xf]
    %v638 = vld [vmem:[%s5 + $0x28] sm:$0xf]
    %v639 = vld [vmem:[%s5 + $0x2c] sm:$0xf]
    %v640 = vld [vmem:[%s5 + $0x30] sm:$0xf]
    %v641 = vld [vmem:[%s5 + $0x34] sm:$0xf]
    %v642 = vld [vmem:[%s5 + $0x38] sm:$0xf]
    %v643 = vld [vmem:[%s5 + $0x3c] sm:$0xf]
    %v644 = vld [vmem:[%s6] sm:$0x1]
    %v646 = vlaneseq
    %v647 = vshrl.u32 %v646, 7
    %v648 = vsub.s32 0, %v647
    %v649 = vrot.slane %v644, %v648
    %v667 = vunpack.c.l.b16 %v628
    %v668 = vunpack.c.l.b16 %v629
    %v669 = vunpack.c.l.b16 %v630
    %v670 = vunpack.c.l.b16 %v631
    %v671 = vunpack.c.l.b16 %v632
    %v672 = vunpack.c.l.b16 %v633
    %v673 = vunpack.c.l.b16 %v634
    %v674 = vunpack.c.l.b16 %v635
    %v675 = vunpack.c.l.b16 %v636
    %v676 = vunpack.c.l.b16 %v637
    %v677 = vunpack.c.l.b16 %v638
    %v678 = vunpack.c.l.b16 %v639
    %v679 = vunpack.c.l.b16 %v640
    %v680 = vunpack.c.l.b16 %v641
    %v681 = vunpack.c.l.b16 %v642
    %v682 = vunpack.c.l.b16 %v643
    %v683 = vpack.c.b16 %v668, %v667
    %v684 = vpack.c.b16 %v670, %v669
    %v685 = vpack.c.b16 %v672, %v671
    %v686 = vpack.c.b16 %v674, %v673
    %v687 = vpack.c.b16 %v676, %v675
    %v688 = vpack.c.b16 %v678, %v677
    %v689 = vpack.c.b16 %v680, %v679
    %v690 = vpack.c.b16 %v682, %v681
    %699 = vmatprep.subr.bf16.mxu0 0
    %700 = vmatpush1.bf16.msra.mxu0 %v690
    %701 = vmatprep.subr.bf16.mxu0 0
    %702 = vmatpush1.bf16.msra.mxu0 %v689
    %703 = vmatprep.subr.bf16.mxu0 0
    %704 = vmatpush1.bf16.msra.mxu0 %v688
    %705 = vmatprep.subr.bf16.mxu0 0
    %706 = vmatpush1.bf16.msra.mxu0 %v687
    %707 = vmatprep.subr.bf16.mxu0 0
    %708 = vmatpush1.bf16.msra.mxu0 %v686
    %709 = vmatprep.subr.bf16.mxu0 0
    %710 = vmatpush1.bf16.msra.mxu0 %v685
    %711 = vmatprep.subr.bf16.mxu0 0
    %712 = vmatpush1.bf16.msra.mxu0 %v684
    %713 = vmatprep.subr.bf16.mxu0 0
    %714 = vmatpush1.bf16.msra.mxu0 %v683
    %715 = vmatprep.subr.bf16.mxu0 0
    %716 = vmatpush2.bf16.msra.mxu0 0
    %717 = vmatprep.subr.bf16.mxu0 0
    %718 = vmatpush2.bf16.msra.mxu0 0
    %719 = vmatprep.subr.bf16.mxu0 0
    %720 = vmatpush2.bf16.msra.mxu0 0
    %721 = vmatprep.subr.bf16.mxu0 0
    %722 = vmatpush2.bf16.msra.mxu0 0
    %723 = vmatprep.subr.bf16.mxu0 0
    %724 = vmatpush2.bf16.msra.mxu0 0
    %725 = vmatprep.subr.bf16.mxu0 0
    %726 = vmatpush2.bf16.msra.mxu0 0
    %727 = vmatprep.subr.bf16.mxu0 0
    %728 = vmatpush2.bf16.msra.mxu0 0
    %729 = vmatprep.subr.bf16.mxu0 0
    %730 = vmatpush2.bf16.msra.mxu0 0
    %731 = vmatprep.mubr.bf16.mxu0 0
    %732 = vmatmul.mubr.bf16.gmra.mxu0 %v627
    %v733 = vpop.f32.mrf.mxu0
    %v734 = vadd.f32 %v649, %v733
    %v735 = vpop.f32.mrf.mxu0
    %v736 = vpop.f32.mrf.mxu0
    %v737 = vadd.f32 %v649, %v736
    %v738 = vpop.f32.mrf.mxu0
    %739 = vdwg.mxu0
    %v740 = vld [vmem:[%s7] sm:$0xf]
    %v741 = vld [vmem:[%s7 + $0x4] sm:$0xf]
    %v742 = vld [vmem:[%s7 + $0x8] sm:$0xf]
    %v743 = vld [vmem:[%s7 + $0xc] sm:$0xf]
    %v744 = vld [vmem:[%s7 + $0x10] sm:$0xf]
    %v745 = vld [vmem:[%s7 + $0x14] sm:$0xf]
    %v746 = vld [vmem:[%s7 + $0x18] sm:$0xf]
    %v747 = vld [vmem:[%s7 + $0x1c] sm:$0xf]
    %v748 = vld [vmem:[%s7 + $0x20] sm:$0xf]
    %v749 = vld [vmem:[%s7 + $0x24] sm:$0xf]
    %v750 = vpack.c.bf16 %v737, %v734
    %v751 = vld [vmem:[%s1] sm:$0xf]
    %v752 = vld [vmem:[%s1 + $0x4] sm:$0xf]
    %v755 = vunpack.c.l.b16 %v751
    %v756 = vunpack.c.l.b16 %v752
    %v757 = vpack.c.b16 %v756, %v755
    %v764 = vunpack.c.l.b16 %v744
    %v765 = vunpack.c.l.b16 %v745
    %v766 = vunpack.c.l.b16 %v746
    %v767 = vunpack.c.l.b16 %v747
    %v768 = vunpack.c.l.b16 %v748
    %v769 = vunpack.c.l.b16 %v749
    %v770 = vpack.c.b16 %v765, %v764
    %v771 = vpack.c.b16 %v767, %v766
    %v772 = vpack.c.b16 %v769, %v768
    %vm776 = vcmask 392192
    %v778 = vsel %vm776, %v757, 0
    %780 = vmatprep.subr.bf16.mxu0 0
    %781 = vmatpush1.bf16.msra.mxu0 0
    %782 = vmatprep.subr.bf16.mxu0 0
    %783 = vmatpush1.bf16.msra.mxu0 0
    %784 = vmatprep.subr.bf16.mxu0 0
    %785 = vmatpush1.bf16.msra.mxu0 0
    %786 = vmatprep.subr.bf16.mxu0 0
    %787 = vmatpush1.bf16.msra.mxu0 0
    %788 = vmatprep.subr.bf16.mxu0 0
    %789 = vmatpush1.bf16.msra.mxu0 0
    %790 = vmatprep.subr.bf16.mxu0 0
    %791 = vmatpush1.bf16.msra.mxu0 %v772
    %792 = vmatprep.subr.bf16.mxu0 0
    %793 = vmatpush1.bf16.msra.mxu0 %v771
    %794 = vmatprep.subr.bf16.mxu0 0
    %795 = vmatpush1.bf16.msra.mxu0 %v770
    %796 = vmatprep.subr.bf16.mxu0 0
    %797 = vmatpush2.bf16.msra.mxu0 0
    %798 = vmatprep.subr.bf16.mxu0 0
    %799 = vmatpush2.bf16.msra.mxu0 0
    %800 = vmatprep.subr.bf16.mxu0 0
    %801 = vmatpush2.bf16.msra.mxu0 0
    %802 = vmatprep.subr.bf16.mxu0 0
    %803 = vmatpush2.bf16.msra.mxu0 0
    %804 = vmatprep.subr.bf16.mxu0 0
    %805 = vmatpush2.bf16.msra.mxu0 0
    %806 = vmatprep.subr.bf16.mxu0 0
    %807 = vmatpush2.bf16.msra.mxu0 0
    %808 = vmatprep.subr.bf16.mxu0 0
    %809 = vmatpush2.bf16.msra.mxu0 0
    %810 = vmatprep.subr.bf16.mxu0 0
    %811 = vmatpush2.bf16.msra.mxu0 0
    %812 = vmatprep.mubr.bf16.mxu0 0
    %813 = vmatmul.mubr.bf16.gmra.mxu0 %v778
    %v814 = vpop.f32.mrf.mxu0
    %v815 = vadd.f32 0.0, %v814
    %v816 = vpop.f32.mrf.mxu0
    %v817 = vpop.f32.mrf.mxu0
    %v818 = vadd.f32 0.0, %v817
    %v819 = vpop.f32.mrf.mxu0
    %820 = vdwg.mxu0
    %v825 = vunpack.c.l.b16 %v740
    %v826 = vunpack.c.l.b16 %v741
    %v827 = vunpack.c.l.b16 %v742
    %v828 = vunpack.c.l.b16 %v743
    %v829 = vpack.c.b16 %v826, %v825
    %v830 = vpack.c.b16 %v828, %v827
    %vm833 = vcmask 261120
    %v835 = vsel %vm833, %v750, 0
    %837 = vmatprep.subr.bf16.mxu0 0
    %838 = vmatpush1.bf16.msra.mxu0 0
    %839 = vmatprep.subr.bf16.mxu0 0
    %840 = vmatpush1.bf16.msra.mxu0 0
    %841 = vmatprep.subr.bf16.mxu0 0
    %842 = vmatpush1.bf16.msra.mxu0 0
    %843 = vmatprep.subr.bf16.mxu0 0
    %844 = vmatpush1.bf16.msra.mxu0 0
    %845 = vmatprep.subr.bf16.mxu0 0
    %846 = vmatpush1.bf16.msra.mxu0 0
    %847 = vmatprep.subr.bf16.mxu0 0
    %848 = vmatpush1.bf16.msra.mxu0 0
    %849 = vmatprep.subr.bf16.mxu0 0
    %850 = vmatpush1.bf16.msra.mxu0 %v830
    %851 = vmatprep.subr.bf16.mxu0 0
    %852 = vmatpush1.bf16.msra.mxu0 %v829
    %853 = vmatprep.subr.bf16.mxu0 0
    %854 = vmatpush2.bf16.msra.mxu0 0
    %855 = vmatprep.subr.bf16.mxu0 0
    %856 = vmatpush2.bf16.msra.mxu0 0
    %857 = vmatprep.subr.bf16.mxu0 0
    %858 = vmatpush2.bf16.msra.mxu0 0
    %859 = vmatprep.subr.bf16.mxu0 0
    %860 = vmatpush2.bf16.msra.mxu0 0
    %861 = vmatprep.subr.bf16.mxu0 0
    %862 = vmatpush2.bf16.msra.mxu0 0
    %863 = vmatprep.subr.bf16.mxu0 0
    %864 = vmatpush2.bf16.msra.mxu0 0
    %865 = vmatprep.subr.bf16.mxu0 0
    %866 = vmatpush2.bf16.msra.mxu0 0
    %867 = vmatprep.subr.bf16.mxu0 0
    %868 = vmatpush2.bf16.msra.mxu0 0
    %869 = vmatprep.mubr.bf16.mxu0 0
    %870 = vmatmul.mubr.bf16.gmra.mxu0 %v835
    %v871 = vpop.f32.mrf.mxu0
    %v872 = vadd.f32 %v815, %v871
    %v873 = vpop.f32.mrf.mxu0
    %v874 = vpop.f32.mrf.mxu0
    %v875 = vadd.f32 %v818, %v874
    %v876 = vpop.f32.mrf.mxu0
    %877 = vdwg.mxu0
    %v878 = vld [vmem:[%s8] sm:$0x1]
    %v880 = vlaneseq
    %v881 = vshrl.u32 %v880, 7
    %v882 = vsub.s32 0, %v881
    %v883 = vrot.slane %v878, %v882
    %v885 = vadd.f32 %v872, %v883
    %v886 = vadd.f32 %v875, %v883
    %v887 = vld [vmem:[%s9] sm:$0x1]
    %v888 = vld [vmem:[%s10] sm:$0x1]
    %vm889 = vcmask 523264
    %v890 = vsel %vm889, %v885, 0.0
    %891 = vadd.xlane.f32.xlu0 %v890
    %v892 = vpop.xlane.xlu0 %891
    %v893 = vsel %vm889, %v886, 0.0
    %894 = vadd.xlane.f32.xlu0 %v893
    %v895 = vpop.xlane.xlu0 %894
    %v896 = vrcp.pop 64.0
    %v897 = vmul.f32 %v892, %v896
    %v898 = vmul.f32 %v895, %v896
    %v899 = vsub.f32 %v885, %v897
    %v900 = vsub.f32 %v886, %v898
    %v901 = vmul.f32 %v899, %v899
    %v902 = vmul.f32 %v900, %v900
    %v903 = vsel %vm889, %v901, 0.0
    %904 = vadd.xlane.f32.xlu0 %v903
    %v905 = vpop.xlane.xlu0 %904
    %v906 = vsel %vm889, %v902, 0.0
    %907 = vadd.xlane.f32.xlu0 %v906
    %v908 = vpop.xlane.xlu0 %907
    %v909 = vmul.f32 %v905, %v896
    %v910 = vmul.f32 %v908, %v896
    %v911 = vadd.f32 %v909, 1e-05
    %v912 = vadd.f32 %v910, 1e-05
    %v913 = vrsqrt.pop %v911
    %v914 = vrsqrt.pop %v912
    %v915 = vmul.f32 %v899, %v913
    %v916 = vmul.f32 %v900, %v914
    %v918 = vlaneseq
    %v919 = vshrl.u32 %v918, 7
    %v920 = vsub.s32 0, %v919
    %v921 = vrot.slane %v887, %v920
    %v923 = vmul.f32 %v915, %v921
    %v924 = vmul.f32 %v916, %v921
    %v926 = vlaneseq
    %v927 = vshrl.u32 %v926, 7
    %v928 = vsub.s32 0, %v927
    %v929 = vrot.slane %v888, %v928
    %v931 = vadd.f32 %v923, %v929
    %v932 = vadd.f32 %v924, %v929
    %v933 = vpack.c.bf16 %v932, %v931
    %v934 = vld [vmem:[%s11] sm:$0xff]
    %v935 = vld [vmem:[%s11 + $0x8] sm:$0xff]
    %v936 = vld [vmem:[%s11 + $0x10] sm:$0xff]
    %v937 = vld [vmem:[%s11 + $0x18] sm:$0xff]
    %v938 = vld [vmem:[%s11 + $0x20] sm:$0xff]
    %v939 = vld [vmem:[%s11 + $0x28] sm:$0xff]
    %v940 = vld [vmem:[%s11 + $0x30] sm:$0xff]
    %v941 = vld [vmem:[%s11 + $0x38] sm:$0xff]
    %v942 = vld [vmem:[%s12] sm:$0x3]
    %v944 = vlaneseq
    %v945 = vshrl.u32 %v944, 7
    %v946 = vsub.s32 0, %v945
    %v947 = vrot.slane %v942, %v946
    %v948 = vlaneseq
    %v949 = vshrl.u32 %v948, 7
    %v950 = vsub.s32 1, %v949
    %v951 = vrot.slane %v942, %v950
    %v962 = vunpack.c.l.b16 %v934
    %v963 = vunpack.c.h.b16 %v934
    %v964 = vunpack.c.l.b16 %v935
    %v965 = vunpack.c.h.b16 %v935
    %v966 = vunpack.c.l.b16 %v936
    %v967 = vunpack.c.h.b16 %v936
    %v968 = vunpack.c.l.b16 %v937
    %v969 = vunpack.c.h.b16 %v937
    %v970 = vunpack.c.l.b16 %v938
    %v971 = vunpack.c.h.b16 %v938
    %v972 = vunpack.c.l.b16 %v939
    %v973 = vunpack.c.h.b16 %v939
    %v974 = vunpack.c.l.b16 %v940
    %v975 = vunpack.c.h.b16 %v940
    %v976 = vunpack.c.l.b16 %v941
    %v977 = vunpack.c.h.b16 %v941
    %v978 = vpack.c.b16 %v964, %v962
    %v979 = vpack.c.b16 %v965, %v963
    %v980 = vpack.c.b16 %v968, %v966
    %v981 = vpack.c.b16 %v969, %v967
    %v982 = vpack.c.b16 %v972, %v970
    %v983 = vpack.c.b16 %v973, %v971
    %v984 = vpack.c.b16 %v976, %v974
    %v985 = vpack.c.b16 %v977, %v975
    %v995 = vsel %vm889, %v933, 0
    %997 = vmatprep.subr.bf16.mxu0 0
    %998 = vmatpush1.bf16.msra.mxu0 0
    %999 = vmatprep.subr.bf16.mxu0 0
    %1000 = vmatpush1.bf16.msra.mxu0 0
    %1001 = vmatprep.subr.bf16.mxu0 0
    %1002 = vmatpush1.bf16.msra.mxu0 0
    %1003 = vmatprep.subr.bf16.mxu0 0
    %1004 = vmatpush1.bf16.msra.mxu0 0
    %1005 = vmatprep.subr.bf16.mxu0 %v985
    %1006 = vmatpush1.bf16.msra.mxu0 %v984
    %1007 = vmatprep.subr.bf16.mxu0 %v983
    %1008 = vmatpush1.bf16.msra.mxu0 %v982
    %1009 = vmatprep.subr.bf16.mxu0 %v981
    %1010 = vmatpush1.bf16.msra.mxu0 %v980
    %1011 = vmatprep.subr.bf16.mxu0 %v979
    %1012 = vmatpush1.bf16.msra.mxu0 %v978
    %1013 = vmatprep.subr.bf16.mxu0 0
    %1014 = vmatpush2.bf16.msra.mxu0 0
    %1015 = vmatprep.subr.bf16.mxu0 0
    %1016 = vmatpush2.bf16.msra.mxu0 0
    %1017 = vmatprep.subr.bf16.mxu0 0
    %1018 = vmatpush2.bf16.msra.mxu0 0
    %1019 = vmatprep.subr.bf16.mxu0 0
    %1020 = vmatpush2.bf16.msra.mxu0 0
    %1021 = vmatprep.subr.bf16.mxu0 0
    %1022 = vmatpush2.bf16.msra.mxu0 0
    %1023 = vmatprep.subr.bf16.mxu0 0
    %1024 = vmatpush2.bf16.msra.mxu0 0
    %1025 = vmatprep.subr.bf16.mxu0 0
    %1026 = vmatpush2.bf16.msra.mxu0 0
    %1027 = vmatprep.subr.bf16.mxu0 0
    %1028 = vmatpush2.bf16.msra.mxu0 0
    %1029 = vmatprep.mubr.bf16.mxu0 0
    %1030 = vmatmul.mubr.bf16.gmra.mxu0 %v995
    %v1031 = vpop.f32.mrf.mxu0
    %v1032 = vadd.f32 %v947, %v1031
    %v1033 = vpop.f32.mrf.mxu0
    %v1034 = vadd.f32 %v951, %v1033
    %v1035 = vpop.f32.mrf.mxu0
    %v1036 = vadd.f32 %v947, %v1035
    %v1037 = vpop.f32.mrf.mxu0
    %v1038 = vadd.f32 %v951, %v1037
    %1039 = vdwg.mxu0
    %v1040 = vxor.u32 %v1032, 2147483648
    %v1041 = vxor.u32 %v1034, 2147483648
    %v1042 = vxor.u32 %v1036, 2147483648
    %v1043 = vxor.u32 %v1038, 2147483648
    %v1044 = vmul.f32 %v1040, 1.442695
    %v1045 = vpow.pop %v1044
    %v1046 = vmul.f32 %v1041, 1.442695
    %v1047 = vpow.pop %v1046
    %v1048 = vmul.f32 %v1042, 1.442695
    %v1049 = vpow.pop %v1048
    %v1050 = vmul.f32 %v1043, 1.442695
    %v1051 = vpow.pop %v1050
    %v1052 = vadd.f32 %v1045, 1.0
    %v1053 = vadd.f32 %v1047, 1.0
    %v1054 = vadd.f32 %v1049, 1.0
    %v1055 = vadd.f32 %v1051, 1.0
    %v1056 = vrcp.pop %v1052
    %v1057 = vmul.f32 1.0, %v1056
    %v1058 = vrcp.pop %v1053
    %v1059 = vmul.f32 1.0, %v1058
    %v1060 = vrcp.pop %v1054
    %v1061 = vmul.f32 1.0, %v1060
    %v1062 = vrcp.pop %v1055
    %v1063 = vmul.f32 1.0, %v1062
    %v1064 = vmul.f32 %v1032, %v1057
    %v1065 = vmul.f32 %v1034, %v1059
    %v1066 = vmul.f32 %v1036, %v1061
    %v1067 = vmul.f32 %v1038, %v1063
    %v1068 = vpack.c.bf16 %v1066, %v1064
    %v1069 = vpack.c.bf16 %v1067, %v1065
    %v1070 = vld [vmem:[%s13] sm:$0xf]
    %v1071 = vld [vmem:[%s13 + $0x4] sm:$0xf]
    %v1072 = vld [vmem:[%s13 + $0x8] sm:$0xf]
    %v1073 = vld [vmem:[%s13 + $0xc] sm:$0xf]
    %v1074 = vld [vmem:[%s13 + $0x10] sm:$0xf]
    %v1075 = vld [vmem:[%s13 + $0x14] sm:$0xf]
    %v1076 = vld [vmem:[%s13 + $0x18] sm:$0xf]
    %v1077 = vld [vmem:[%s13 + $0x1c] sm:$0xf]
    %v1078 = vld [vmem:[%s13 + $0x20] sm:$0xf]
    %v1079 = vld [vmem:[%s13 + $0x24] sm:$0xf]
    %v1080 = vld [vmem:[%s13 + $0x28] sm:$0xf]
    %v1081 = vld [vmem:[%s13 + $0x2c] sm:$0xf]
    %v1082 = vld [vmem:[%s13 + $0x30] sm:$0xf]
    %v1083 = vld [vmem:[%s13 + $0x34] sm:$0xf]
    %v1084 = vld [vmem:[%s13 + $0x38] sm:$0xf]
    %v1085 = vld [vmem:[%s13 + $0x3c] sm:$0xf]
    %v1086 = vld [vmem:[%s13 + $0x40] sm:$0xf]
    %v1087 = vld [vmem:[%s13 + $0x44] sm:$0xf]
    %v1088 = vld [vmem:[%s13 + $0x48] sm:$0xf]
    %v1089 = vld [vmem:[%s13 + $0x4c] sm:$0xf]
    %v1090 = vld [vmem:[%s13 + $0x50] sm:$0xf]
    %v1091 = vld [vmem:[%s13 + $0x54] sm:$0xf]
    %v1092 = vld [vmem:[%s13 + $0x58] sm:$0xf]
    %v1093 = vld [vmem:[%s13 + $0x5c] sm:$0xf]
    %v1094 = vld [vmem:[%s13 + $0x60] sm:$0xf]
    %v1095 = vld [vmem:[%s13 + $0x64] sm:$0xf]
    %v1096 = vld [vmem:[%s13 + $0x68] sm:$0xf]
    %v1097 = vld [vmem:[%s13 + $0x6c] sm:$0xf]
    %v1098 = vld [vmem:[%s13 + $0x70] sm:$0xf]
    %v1099 = vld [vmem:[%s13 + $0x74] sm:$0xf]
    %v1100 = vld [vmem:[%s13 + $0x78] sm:$0xf]
    %v1101 = vld [vmem:[%s13 + $0x7c] sm:$0xf]
    %v1102 = vld [vmem:[%s14] sm:$0x1]
    %v1104 = vlaneseq
    %v1105 = vshrl.u32 %v1104, 7
    %v1106 = vsub.s32 0, %v1105
    %v1107 = vrot.slane %v1102, %v1106
    %v1141 = vunpack.c.l.b16 %v1070
    %v1142 = vunpack.c.l.b16 %v1071
    %v1143 = vunpack.c.l.b16 %v1072
    %v1144 = vunpack.c.l.b16 %v1073
    %v1145 = vunpack.c.l.b16 %v1074
    %v1146 = vunpack.c.l.b16 %v1075
    %v1147 = vunpack.c.l.b16 %v1076
    %v1148 = vunpack.c.l.b16 %v1077
    %v1149 = vunpack.c.l.b16 %v1078
    %v1150 = vunpack.c.l.b16 %v1079
    %v1151 = vunpack.c.l.b16 %v1080
    %v1152 = vunpack.c.l.b16 %v1081
    %v1153 = vunpack.c.l.b16 %v1082
    %v1154 = vunpack.c.l.b16 %v1083
    %v1155 = vunpack.c.l.b16 %v1084
    %v1156 = vunpack.c.l.b16 %v1085
    %v1157 = vunpack.c.l.b16 %v1086
    %v1158 = vunpack.c.l.b16 %v1087
    %v1159 = vunpack.c.l.b16 %v1088
    %v1160 = vunpack.c.l.b16 %v1089
    %v1161 = vunpack.c.l.b16 %v1090
    %v1162 = vunpack.c.l.b16 %v1091
    %v1163 = vunpack.c.l.b16 %v1092
    %v1164 = vunpack.c.l.b16 %v1093
    %v1165 = vunpack.c.l.b16 %v1094
    %v1166 = vunpack.c.l.b16 %v1095
    %v1167 = vunpack.c.l.b16 %v1096
    %v1168 = vunpack.c.l.b16 %v1097
    %v1169 = vunpack.c.l.b16 %v1098
    %v1170 = vunpack.c.l.b16 %v1099
    %v1171 = vunpack.c.l.b16 %v1100
    %v1172 = vunpack.c.l.b16 %v1101
    %v1173 = vpack.c.b16 %v1142, %v1141
    %v1174 = vpack.c.b16 %v1144, %v1143
    %v1175 = vpack.c.b16 %v1146, %v1145
    %v1176 = vpack.c.b16 %v1148, %v1147
    %v1177 = vpack.c.b16 %v1150, %v1149
    %v1178 = vpack.c.b16 %v1152, %v1151
    %v1179 = vpack.c.b16 %v1154, %v1153
    %v1180 = vpack.c.b16 %v1156, %v1155
    %v1181 = vpack.c.b16 %v1158, %v1157
    %v1182 = vpack.c.b16 %v1160, %v1159
    %v1183 = vpack.c.b16 %v1162, %v1161
    %v1184 = vpack.c.b16 %v1164, %v1163
    %v1185 = vpack.c.b16 %v1166, %v1165
    %v1186 = vpack.c.b16 %v1168, %v1167
    %v1187 = vpack.c.b16 %v1170, %v1169
    %v1188 = vpack.c.b16 %v1172, %v1171
    %1205 = vmatprep.subr.bf16.mxu0 0
    %1206 = vmatpush1.bf16.msra.mxu0 %v1180
    %1207 = vmatprep.subr.bf16.mxu0 0
    %1208 = vmatpush1.bf16.msra.mxu0 %v1179
    %1209 = vmatprep.subr.bf16.mxu0 0
    %1210 = vmatpush1.bf16.msra.mxu0 %v1178
    %1211 = vmatprep.subr.bf16.mxu0 0
    %1212 = vmatpush1.bf16.msra.mxu0 %v1177
    %1213 = vmatprep.subr.bf16.mxu0 0
    %1214 = vmatpush1.bf16.msra.mxu0 %v1176
    %1215 = vmatprep.subr.bf16.mxu0 0
    %1216 = vmatpush1.bf16.msra.mxu0 %v1175
    %1217 = vmatprep.subr.bf16.mxu0 0
    %1218 = vmatpush1.bf16.msra.mxu0 %v1174
    %1219 = vmatprep.subr.bf16.mxu0 0
    %1220 = vmatpush1.bf16.msra.mxu0 %v1173
    %1221 = vmatprep.subr.bf16.mxu0 0
    %1222 = vmatpush2.bf16.msra.mxu0 %v1188
    %1223 = vmatprep.subr.bf16.mxu0 0
    %1224 = vmatpush2.bf16.msra.mxu0 %v1187
    %1225 = vmatprep.subr.bf16.mxu0 0
    %1226 = vmatpush2.bf16.msra.mxu0 %v1186
    %1227 = vmatprep.subr.bf16.mxu0 0
    %1228 = vmatpush2.bf16.msra.mxu0 %v1185
    %1229 = vmatprep.subr.bf16.mxu0 0
    %1230 = vmatpush2.bf16.msra.mxu0 %v1184
    %1231 = vmatprep.subr.bf16.mxu0 0
    %1232 = vmatpush2.bf16.msra.mxu0 %v1183
    %1233 = vmatprep.subr.bf16.mxu0 0
    %1234 = vmatpush2.bf16.msra.mxu0 %v1182
    %1235 = vmatprep.subr.bf16.mxu0 0
    %1236 = vmatpush2.bf16.msra.mxu0 %v1181
    %1237 = vmatprep.mubr.bf16.mxu0 %v1069
    %1238 = vmatmul.mubr.bf16.gmra.mxu0 %v1068
    %v1239 = vpop.f32.mrf.mxu0
    %v1240 = vadd.f32 %v1107, %v1239
    %v1241 = vpop.f32.mrf.mxu0
    %v1242 = vpop.f32.mrf.mxu0
    %v1243 = vadd.f32 %v1107, %v1242
    %v1244 = vpop.f32.mrf.mxu0
    %1245 = vdwg.mxu0
    %v1246 = vadd.f32 %v885, %v1240
    %v1247 = vadd.f32 %v886, %v1243
    %s1248 = scalar_lea.vmem %s9, 1
    %v1249 = vld [vmem:[%s1248] sm:$0x1]
    %s1250 = scalar_lea.vmem %s10, 1
    %v1251 = vld [vmem:[%s1250] sm:$0x1]
    %v1252 = vsel %vm889, %v1246, 0.0
    %1253 = vadd.xlane.f32.xlu0 %v1252
    %v1254 = vpop.xlane.xlu0 %1253
    %v1255 = vsel %vm889, %v1247, 0.0
    %1256 = vadd.xlane.f32.xlu0 %v1255
    %v1257 = vpop.xlane.xlu0 %1256
    %v1258 = vmul.f32 %v1254, %v896
    %v1259 = vmul.f32 %v1257, %v896
    %v1260 = vsub.f32 %v1246, %v1258
    %v1261 = vsub.f32 %v1247, %v1259
    %v1262 = vmul.f32 %v1260, %v1260
    %v1263 = vmul.f32 %v1261, %v1261
    %v1264 = vsel %vm889, %v1262, 0.0
    %1265 = vadd.xlane.f32.xlu0 %v1264
    %v1266 = vpop.xlane.xlu0 %1265
    %v1267 = vsel %vm889, %v1263, 0.0
    %1268 = vadd.xlane.f32.xlu0 %v1267
    %v1269 = vpop.xlane.xlu0 %1268
    %v1270 = vmul.f32 %v1266, %v896
    %v1271 = vmul.f32 %v1269, %v896
    %v1272 = vadd.f32 %v1270, 1e-05
    %v1273 = vadd.f32 %v1271, 1e-05
    %v1274 = vrsqrt.pop %v1272
    %v1275 = vrsqrt.pop %v1273
    %v1276 = vmul.f32 %v1260, %v1274
    %v1277 = vmul.f32 %v1261, %v1275
    %v1279 = vlaneseq
    %v1280 = vshrl.u32 %v1279, 7
    %v1281 = vsub.s32 0, %v1280
    %v1282 = vrot.slane %v1249, %v1281
    %v1284 = vmul.f32 %v1276, %v1282
    %v1285 = vmul.f32 %v1277, %v1282
    %v1287 = vlaneseq
    %v1288 = vshrl.u32 %v1287, 7
    %v1289 = vsub.s32 0, %v1288
    %v1290 = vrot.slane %v1251, %v1289
    %v1292 = vadd.f32 %v1284, %v1290
    %v1293 = vadd.f32 %v1285, %v1290
    %v1294 = vpack.c.bf16 %v1293, %v1292
    %s1295 = scalar_lea.vmem %s11, 64
    %v1296 = vld [vmem:[%s1295] sm:$0xff]
    %v1297 = vld [vmem:[%s1295 + $0x8] sm:$0xff]
    %v1298 = vld [vmem:[%s1295 + $0x10] sm:$0xff]
    %v1299 = vld [vmem:[%s1295 + $0x18] sm:$0xff]
    %v1300 = vld [vmem:[%s1295 + $0x20] sm:$0xff]
    %v1301 = vld [vmem:[%s1295 + $0x28] sm:$0xff]
    %v1302 = vld [vmem:[%s1295 + $0x30] sm:$0xff]
    %v1303 = vld [vmem:[%s1295 + $0x38] sm:$0xff]
    %s1304 = scalar_lea.vmem %s12, 2
    %v1305 = vld [vmem:[%s1304] sm:$0x3]
    %v1307 = vlaneseq
    %v1308 = vshrl.u32 %v1307, 7
    %v1309 = vsub.s32 0, %v1308
    %v1310 = vrot.slane %v1305, %v1309
    %v1311 = vlaneseq
    %v1312 = vshrl.u32 %v1311, 7
    %v1313 = vsub.s32 1, %v1312
    %v1314 = vrot.slane %v1305, %v1313
    %v1325 = vunpack.c.l.b16 %v1296
    %v1326 = vunpack.c.h.b16 %v1296
    %v1327 = vunpack.c.l.b16 %v1297
    %v1328 = vunpack.c.h.b16 %v1297
    %v1329 = vunpack.c.l.b16 %v1298
    %v1330 = vunpack.c.h.b16 %v1298
    %v1331 = vunpack.c.l.b16 %v1299
    %v1332 = vunpack.c.h.b16 %v1299
    %v1333 = vunpack.c.l.b16 %v1300
    %v1334 = vunpack.c.h.b16 %v1300
    %v1335 = vunpack.c.l.b16 %v1301
    %v1336 = vunpack.c.h.b16 %v1301
    %v1337 = vunpack.c.l.b16 %v1302
    %v1338 = vunpack.c.h.b16 %v1302
    %v1339 = vunpack.c.l.b16 %v1303
    %v1340 = vunpack.c.h.b16 %v1303
    %v1341 = vpack.c.b16 %v1327, %v1325
    %v1342 = vpack.c.b16 %v1328, %v1326
    %v1343 = vpack.c.b16 %v1331, %v1329
    %v1344 = vpack.c.b16 %v1332, %v1330
    %v1345 = vpack.c.b16 %v1335, %v1333
    %v1346 = vpack.c.b16 %v1336, %v1334
    %v1347 = vpack.c.b16 %v1339, %v1337
    %v1348 = vpack.c.b16 %v1340, %v1338
    %v1358 = vsel %vm889, %v1294, 0
    %1360 = vmatprep.subr.bf16.mxu0 0
    %1361 = vmatpush1.bf16.msra.mxu0 0
    %1362 = vmatprep.subr.bf16.mxu0 0
    %1363 = vmatpush1.bf16.msra.mxu0 0
    %1364 = vmatprep.subr.bf16.mxu0 0
    %1365 = vmatpush1.bf16.msra.mxu0 0
    %1366 = vmatprep.subr.bf16.mxu0 0
    %1367 = vmatpush1.bf16.msra.mxu0 0
    %1368 = vmatprep.subr.bf16.mxu0 %v1348
    %1369 = vmatpush1.bf16.msra.mxu0 %v1347
    %1370 = vmatprep.subr.bf16.mxu0 %v1346
    %1371 = vmatpush1.bf16.msra.mxu0 %v1345
    %1372 = vmatprep.subr.bf16.mxu0 %v1344
    %1373 = vmatpush1.bf16.msra.mxu0 %v1343
    %1374 = vmatprep.subr.bf16.mxu0 %v1342
    %1375 = vmatpush1.bf16.msra.mxu0 %v1341
    %1376 = vmatprep.subr.bf16.mxu0 0
    %1377 = vmatpush2.bf16.msra.mxu0 0
    %1378 = vmatprep.subr.bf16.mxu0 0
    %1379 = vmatpush2.bf16.msra.mxu0 0
    %1380 = vmatprep.subr.bf16.mxu0 0
    %1381 = vmatpush2.bf16.msra.mxu0 0
    %1382 = vmatprep.subr.bf16.mxu0 0
    %1383 = vmatpush2.bf16.msra.mxu0 0
    %1384 = vmatprep.subr.bf16.mxu0 0
    %1385 = vmatpush2.bf16.msra.mxu0 0
    %1386 = vmatprep.subr.bf16.mxu0 0
    %1387 = vmatpush2.bf16.msra.mxu0 0
    %1388 = vmatprep.subr.bf16.mxu0 0
    %1389 = vmatpush2.bf16.msra.mxu0 0
    %1390 = vmatprep.subr.bf16.mxu0 0
    %1391 = vmatpush2.bf16.msra.mxu0 0
    %1392 = vmatprep.mubr.bf16.mxu0 0
    %1393 = vmatmul.mubr.bf16.gmra.mxu0 %v1358
    %v1394 = vpop.f32.mrf.mxu0
    %v1395 = vadd.f32 %v1310, %v1394
    %v1396 = vpop.f32.mrf.mxu0
    %v1397 = vadd.f32 %v1314, %v1396
    %v1398 = vpop.f32.mrf.mxu0
    %v1399 = vadd.f32 %v1310, %v1398
    %v1400 = vpop.f32.mrf.mxu0
    %v1401 = vadd.f32 %v1314, %v1400
    %1402 = vdwg.mxu0
    %v1403 = vxor.u32 %v1395, 2147483648
    %v1404 = vxor.u32 %v1397, 2147483648
    %v1405 = vxor.u32 %v1399, 2147483648
    %v1406 = vxor.u32 %v1401, 2147483648
    %v1407 = vmul.f32 %v1403, 1.442695
    %v1408 = vpow.pop %v1407
    %v1409 = vmul.f32 %v1404, 1.442695
    %v1410 = vpow.pop %v1409
    %v1411 = vmul.f32 %v1405, 1.442695
    %v1412 = vpow.pop %v1411
    %v1413 = vmul.f32 %v1406, 1.442695
    %v1414 = vpow.pop %v1413
    %v1415 = vadd.f32 %v1408, 1.0
    %v1416 = vadd.f32 %v1410, 1.0
    %v1417 = vadd.f32 %v1412, 1.0
    %v1418 = vadd.f32 %v1414, 1.0
    %v1419 = vrcp.pop %v1415
    %v1420 = vmul.f32 1.0, %v1419
    %v1421 = vrcp.pop %v1416
    %v1422 = vmul.f32 1.0, %v1421
    %v1423 = vrcp.pop %v1417
    %v1424 = vmul.f32 1.0, %v1423
    %v1425 = vrcp.pop %v1418
    %v1426 = vmul.f32 1.0, %v1425
    %v1427 = vmul.f32 %v1395, %v1420
    %v1428 = vmul.f32 %v1397, %v1422
    %v1429 = vmul.f32 %v1399, %v1424
    %v1430 = vmul.f32 %v1401, %v1426
    %v1431 = vpack.c.bf16 %v1429, %v1427
    %v1432 = vpack.c.bf16 %v1430, %v1428
    %s1433 = scalar_lea.vmem %s13, 128
    %v1434 = vld [vmem:[%s1433] sm:$0xf]
    %v1435 = vld [vmem:[%s1433 + $0x4] sm:$0xf]
    %v1436 = vld [vmem:[%s1433 + $0x8] sm:$0xf]
    %v1437 = vld [vmem:[%s1433 + $0xc] sm:$0xf]
    %v1438 = vld [vmem:[%s1433 + $0x10] sm:$0xf]
    %v1439 = vld [vmem:[%s1433 + $0x14] sm:$0xf]
    %v1440 = vld [vmem:[%s1433 + $0x18] sm:$0xf]
    %v1441 = vld [vmem:[%s1433 + $0x1c] sm:$0xf]
    %v1442 = vld [vmem:[%s1433 + $0x20] sm:$0xf]
    %v1443 = vld [vmem:[%s1433 + $0x24] sm:$0xf]
    %v1444 = vld [vmem:[%s1433 + $0x28] sm:$0xf]
    %v1445 = vld [vmem:[%s1433 + $0x2c] sm:$0xf]
    %v1446 = vld [vmem:[%s1433 + $0x30] sm:$0xf]
    %v1447 = vld [vmem:[%s1433 + $0x34] sm:$0xf]
    %v1448 = vld [vmem:[%s1433 + $0x38] sm:$0xf]
    %v1449 = vld [vmem:[%s1433 + $0x3c] sm:$0xf]
    %v1450 = vld [vmem:[%s1433 + $0x40] sm:$0xf]
    %v1451 = vld [vmem:[%s1433 + $0x44] sm:$0xf]
    %v1452 = vld [vmem:[%s1433 + $0x48] sm:$0xf]
    %v1453 = vld [vmem:[%s1433 + $0x4c] sm:$0xf]
    %v1454 = vld [vmem:[%s1433 + $0x50] sm:$0xf]
    %v1455 = vld [vmem:[%s1433 + $0x54] sm:$0xf]
    %v1456 = vld [vmem:[%s1433 + $0x58] sm:$0xf]
    %v1457 = vld [vmem:[%s1433 + $0x5c] sm:$0xf]
    %v1458 = vld [vmem:[%s1433 + $0x60] sm:$0xf]
    %v1459 = vld [vmem:[%s1433 + $0x64] sm:$0xf]
    %v1460 = vld [vmem:[%s1433 + $0x68] sm:$0xf]
    %v1461 = vld [vmem:[%s1433 + $0x6c] sm:$0xf]
    %v1462 = vld [vmem:[%s1433 + $0x70] sm:$0xf]
    %v1463 = vld [vmem:[%s1433 + $0x74] sm:$0xf]
    %v1464 = vld [vmem:[%s1433 + $0x78] sm:$0xf]
    %v1465 = vld [vmem:[%s1433 + $0x7c] sm:$0xf]
    %s1466 = scalar_lea.vmem %s14, 1
    %v1467 = vld [vmem:[%s1466] sm:$0x1]
    %v1469 = vlaneseq
    %v1470 = vshrl.u32 %v1469, 7
    %v1471 = vsub.s32 0, %v1470
    %v1472 = vrot.slane %v1467, %v1471
    %v1506 = vunpack.c.l.b16 %v1434
    %v1507 = vunpack.c.l.b16 %v1435
    %v1508 = vunpack.c.l.b16 %v1436
    %v1509 = vunpack.c.l.b16 %v1437
    %v1510 = vunpack.c.l.b16 %v1438
    %v1511 = vunpack.c.l.b16 %v1439
    %v1512 = vunpack.c.l.b16 %v1440
    %v1513 = vunpack.c.l.b16 %v1441
    %v1514 = vunpack.c.l.b16 %v1442
    %v1515 = vunpack.c.l.b16 %v1443
    %v1516 = vunpack.c.l.b16 %v1444
    %v1517 = vunpack.c.l.b16 %v1445
    %v1518 = vunpack.c.l.b16 %v1446
    %v1519 = vunpack.c.l.b16 %v1447
    %v1520 = vunpack.c.l.b16 %v1448
    %v1521 = vunpack.c.l.b16 %v1449
    %v1522 = vunpack.c.l.b16 %v1450
    %v1523 = vunpack.c.l.b16 %v1451
    %v1524 = vunpack.c.l.b16 %v1452
    %v1525 = vunpack.c.l.b16 %v1453
    %v1526 = vunpack.c.l.b16 %v1454
    %v1527 = vunpack.c.l.b16 %v1455
    %v1528 = vunpack.c.l.b16 %v1456
    %v1529 = vunpack.c.l.b16 %v1457
    %v1530 = vunpack.c.l.b16 %v1458
    %v1531 = vunpack.c.l.b16 %v1459
    %v1532 = vunpack.c.l.b16 %v1460
    %v1533 = vunpack.c.l.b16 %v1461
    %v1534 = vunpack.c.l.b16 %v1462
    %v1535 = vunpack.c.l.b16 %v1463
    %v1536 = vunpack.c.l.b16 %v1464
    %v1537 = vunpack.c.l.b16 %v1465
    %v1538 = vpack.c.b16 %v1507, %v1506
    %v1539 = vpack.c.b16 %v1509, %v1508
    %v1540 = vpack.c.b16 %v1511, %v1510
    %v1541 = vpack.c.b16 %v1513, %v1512
    %v1542 = vpack.c.b16 %v1515, %v1514
    %v1543 = vpack.c.b16 %v1517, %v1516
    %v1544 = vpack.c.b16 %v1519, %v1518
    %v1545 = vpack.c.b16 %v1521, %v1520
    %v1546 = vpack.c.b16 %v1523, %v1522
    %v1547 = vpack.c.b16 %v1525, %v1524
    %v1548 = vpack.c.b16 %v1527, %v1526
    %v1549 = vpack.c.b16 %v1529, %v1528
    %v1550 = vpack.c.b16 %v1531, %v1530
    %v1551 = vpack.c.b16 %v1533, %v1532
    %v1552 = vpack.c.b16 %v1535, %v1534
    %v1553 = vpack.c.b16 %v1537, %v1536
    %1570 = vmatprep.subr.bf16.mxu0 0
    %1571 = vmatpush1.bf16.msra.mxu0 %v1545
    %1572 = vmatprep.subr.bf16.mxu0 0
    %1573 = vmatpush1.bf16.msra.mxu0 %v1544
    %1574 = vmatprep.subr.bf16.mxu0 0
    %1575 = vmatpush1.bf16.msra.mxu0 %v1543
    %1576 = vmatprep.subr.bf16.mxu0 0
    %1577 = vmatpush1.bf16.msra.mxu0 %v1542
    %1578 = vmatprep.subr.bf16.mxu0 0
    %1579 = vmatpush1.bf16.msra.mxu0 %v1541
    %1580 = vmatprep.subr.bf16.mxu0 0
    %1581 = vmatpush1.bf16.msra.mxu0 %v1540
    %1582 = vmatprep.subr.bf16.mxu0 0
    %1583 = vmatpush1.bf16.msra.mxu0 %v1539
    %1584 = vmatprep.subr.bf16.mxu0 0
    %1585 = vmatpush1.bf16.msra.mxu0 %v1538
    %1586 = vmatprep.subr.bf16.mxu0 0
    %1587 = vmatpush2.bf16.msra.mxu0 %v1553
    %1588 = vmatprep.subr.bf16.mxu0 0
    %1589 = vmatpush2.bf16.msra.mxu0 %v1552
    %1590 = vmatprep.subr.bf16.mxu0 0
    %1591 = vmatpush2.bf16.msra.mxu0 %v1551
    %1592 = vmatprep.subr.bf16.mxu0 0
    %1593 = vmatpush2.bf16.msra.mxu0 %v1550
    %1594 = vmatprep.subr.bf16.mxu0 0
    %1595 = vmatpush2.bf16.msra.mxu0 %v1549
    %1596 = vmatprep.subr.bf16.mxu0 0
    %1597 = vmatpush2.bf16.msra.mxu0 %v1548
    %1598 = vmatprep.subr.bf16.mxu0 0
    %1599 = vmatpush2.bf16.msra.mxu0 %v1547
    %1600 = vmatprep.subr.bf16.mxu0 0
    %1601 = vmatpush2.bf16.msra.mxu0 %v1546
    %1602 = vmatprep.mubr.bf16.mxu0 %v1432
    %1603 = vmatmul.mubr.bf16.gmra.mxu0 %v1431
    %v1604 = vpop.f32.mrf.mxu0
    %v1605 = vadd.f32 %v1472, %v1604
    %v1606 = vpop.f32.mrf.mxu0
    %v1607 = vpop.f32.mrf.mxu0
    %v1608 = vadd.f32 %v1472, %v1607
    %v1609 = vpop.f32.mrf.mxu0
    %1610 = vdwg.mxu0
    %v1611 = vadd.f32 %v1246, %v1605
    %v1612 = vadd.f32 %v1247, %v1608
    %s1613 = scalar_lea.vmem %s9, 2
    %v1614 = vld [vmem:[%s1613] sm:$0x1]
    %s1615 = scalar_lea.vmem %s10, 2
    %v1616 = vld [vmem:[%s1615] sm:$0x1]
    %v1617 = vsel %vm889, %v1611, 0.0
    %1618 = vadd.xlane.f32.xlu0 %v1617
    %v1619 = vpop.xlane.xlu0 %1618
    %v1620 = vsel %vm889, %v1612, 0.0
    %1621 = vadd.xlane.f32.xlu0 %v1620
    %v1622 = vpop.xlane.xlu0 %1621
    %v1623 = vmul.f32 %v1619, %v896
    %v1624 = vmul.f32 %v1622, %v896
    %v1625 = vsub.f32 %v1611, %v1623
    %v1626 = vsub.f32 %v1612, %v1624
    %v1627 = vmul.f32 %v1625, %v1625
    %v1628 = vmul.f32 %v1626, %v1626
    %v1629 = vsel %vm889, %v1627, 0.0
    %1630 = vadd.xlane.f32.xlu0 %v1629
    %v1631 = vpop.xlane.xlu0 %1630
    %v1632 = vsel %vm889, %v1628, 0.0
    %1633 = vadd.xlane.f32.xlu0 %v1632
    %v1634 = vpop.xlane.xlu0 %1633
    %v1635 = vmul.f32 %v1631, %v896
    %v1636 = vmul.f32 %v1634, %v896
    %v1637 = vadd.f32 %v1635, 1e-05
    %v1638 = vadd.f32 %v1636, 1e-05
    %v1639 = vrsqrt.pop %v1637
    %v1640 = vrsqrt.pop %v1638
    %v1641 = vmul.f32 %v1625, %v1639
    %v1642 = vmul.f32 %v1626, %v1640
    %v1644 = vlaneseq
    %v1645 = vshrl.u32 %v1644, 7
    %v1646 = vsub.s32 0, %v1645
    %v1647 = vrot.slane %v1614, %v1646
    %v1649 = vmul.f32 %v1641, %v1647
    %v1650 = vmul.f32 %v1642, %v1647
    %v1652 = vlaneseq
    %v1653 = vshrl.u32 %v1652, 7
    %v1654 = vsub.s32 0, %v1653
    %v1655 = vrot.slane %v1616, %v1654
    %v1657 = vadd.f32 %v1649, %v1655
    %v1658 = vadd.f32 %v1650, %v1655
    %v1659 = vpack.c.bf16 %v1658, %v1657
    %s1660 = scalar_lea.vmem %s11, 128
    %v1661 = vld [vmem:[%s1660] sm:$0xff]
    %v1662 = vld [vmem:[%s1660 + $0x8] sm:$0xff]
    %v1663 = vld [vmem:[%s1660 + $0x10] sm:$0xff]
    %v1664 = vld [vmem:[%s1660 + $0x18] sm:$0xff]
    %v1665 = vld [vmem:[%s1660 + $0x20] sm:$0xff]
    %v1666 = vld [vmem:[%s1660 + $0x28] sm:$0xff]
    %v1667 = vld [vmem:[%s1660 + $0x30] sm:$0xff]
    %v1668 = vld [vmem:[%s1660 + $0x38] sm:$0xff]
    %s1669 = scalar_lea.vmem %s12, 4
    %v1670 = vld [vmem:[%s1669] sm:$0x3]
    %v1672 = vlaneseq
    %v1673 = vshrl.u32 %v1672, 7
    %v1674 = vsub.s32 0, %v1673
    %v1675 = vrot.slane %v1670, %v1674
    %v1676 = vlaneseq
    %v1677 = vshrl.u32 %v1676, 7
    %v1678 = vsub.s32 1, %v1677
    %v1679 = vrot.slane %v1670, %v1678
    %v1690 = vunpack.c.l.b16 %v1661
    %v1691 = vunpack.c.h.b16 %v1661
    %v1692 = vunpack.c.l.b16 %v1662
    %v1693 = vunpack.c.h.b16 %v1662
    %v1694 = vunpack.c.l.b16 %v1663
    %v1695 = vunpack.c.h.b16 %v1663
    %v1696 = vunpack.c.l.b16 %v1664
    %v1697 = vunpack.c.h.b16 %v1664
    %v1698 = vunpack.c.l.b16 %v1665
    %v1699 = vunpack.c.h.b16 %v1665
    %v1700 = vunpack.c.l.b16 %v1666
    %v1701 = vunpack.c.h.b16 %v1666
    %v1702 = vunpack.c.l.b16 %v1667
    %v1703 = vunpack.c.h.b16 %v1667
    %v1704 = vunpack.c.l.b16 %v1668
    %v1705 = vunpack.c.h.b16 %v1668
    %v1706 = vpack.c.b16 %v1692, %v1690
    %v1707 = vpack.c.b16 %v1693, %v1691
    %v1708 = vpack.c.b16 %v1696, %v1694
    %v1709 = vpack.c.b16 %v1697, %v1695
    %v1710 = vpack.c.b16 %v1700, %v1698
    %v1711 = vpack.c.b16 %v1701, %v1699
    %v1712 = vpack.c.b16 %v1704, %v1702
    %v1713 = vpack.c.b16 %v1705, %v1703
    %v1723 = vsel %vm889, %v1659, 0
    %1725 = vmatprep.subr.bf16.mxu0 0
    %1726 = vmatpush1.bf16.msra.mxu0 0
    %1727 = vmatprep.subr.bf16.mxu0 0
    %1728 = vmatpush1.bf16.msra.mxu0 0
    %1729 = vmatprep.subr.bf16.mxu0 0
    %1730 = vmatpush1.bf16.msra.mxu0 0
    %1731 = vmatprep.subr.bf16.mxu0 0
    %1732 = vmatpush1.bf16.msra.mxu0 0
    %1733 = vmatprep.subr.bf16.mxu0 %v1713
    %1734 = vmatpush1.bf16.msra.mxu0 %v1712
    %1735 = vmatprep.subr.bf16.mxu0 %v1711
    %1736 = vmatpush1.bf16.msra.mxu0 %v1710
    %1737 = vmatprep.subr.bf16.mxu0 %v1709
    %1738 = vmatpush1.bf16.msra.mxu0 %v1708
    %1739 = vmatprep.subr.bf16.mxu0 %v1707
    %1740 = vmatpush1.bf16.msra.mxu0 %v1706
    %1741 = vmatprep.subr.bf16.mxu0 0
    %1742 = vmatpush2.bf16.msra.mxu0 0
    %1743 = vmatprep.subr.bf16.mxu0 0
    %1744 = vmatpush2.bf16.msra.mxu0 0
    %1745 = vmatprep.subr.bf16.mxu0 0
    %1746 = vmatpush2.bf16.msra.mxu0 0
    %1747 = vmatprep.subr.bf16.mxu0 0
    %1748 = vmatpush2.bf16.msra.mxu0 0
    %1749 = vmatprep.subr.bf16.mxu0 0
    %1750 = vmatpush2.bf16.msra.mxu0 0
    %1751 = vmatprep.subr.bf16.mxu0 0
    %1752 = vmatpush2.bf16.msra.mxu0 0
    %1753 = vmatprep.subr.bf16.mxu0 0
    %1754 = vmatpush2.bf16.msra.mxu0 0
    %1755 = vmatprep.subr.bf16.mxu0 0
    %1756 = vmatpush2.bf16.msra.mxu0 0
    %1757 = vmatprep.mubr.bf16.mxu0 0
    %1758 = vmatmul.mubr.bf16.gmra.mxu0 %v1723
    %v1759 = vpop.f32.mrf.mxu0
    %v1760 = vadd.f32 %v1675, %v1759
    %v1761 = vpop.f32.mrf.mxu0
    %v1762 = vadd.f32 %v1679, %v1761
    %v1763 = vpop.f32.mrf.mxu0
    %v1764 = vadd.f32 %v1675, %v1763
    %v1765 = vpop.f32.mrf.mxu0
    %v1766 = vadd.f32 %v1679, %v1765
    %1767 = vdwg.mxu0
    %v1768 = vxor.u32 %v1760, 2147483648
    %v1769 = vxor.u32 %v1762, 2147483648
    %v1770 = vxor.u32 %v1764, 2147483648
    %v1771 = vxor.u32 %v1766, 2147483648
    %v1772 = vmul.f32 %v1768, 1.442695
    %v1773 = vpow.pop %v1772
    %v1774 = vmul.f32 %v1769, 1.442695
    %v1775 = vpow.pop %v1774
    %v1776 = vmul.f32 %v1770, 1.442695
    %v1777 = vpow.pop %v1776
    %v1778 = vmul.f32 %v1771, 1.442695
    %v1779 = vpow.pop %v1778
    %v1780 = vadd.f32 %v1773, 1.0
    %v1781 = vadd.f32 %v1775, 1.0
    %v1782 = vadd.f32 %v1777, 1.0
    %v1783 = vadd.f32 %v1779, 1.0
    %v1784 = vrcp.pop %v1780
    %v1785 = vmul.f32 1.0, %v1784
    %v1786 = vrcp.pop %v1781
    %v1787 = vmul.f32 1.0, %v1786
    %v1788 = vrcp.pop %v1782
    %v1789 = vmul.f32 1.0, %v1788
    %v1790 = vrcp.pop %v1783
    %v1791 = vmul.f32 1.0, %v1790
    %v1792 = vmul.f32 %v1760, %v1785
    %v1793 = vmul.f32 %v1762, %v1787
    %v1794 = vmul.f32 %v1764, %v1789
    %v1795 = vmul.f32 %v1766, %v1791
    %v1796 = vpack.c.bf16 %v1794, %v1792
    %v1797 = vpack.c.bf16 %v1795, %v1793
    %s1798 = scalar_lea.vmem %s13, 256
    %v1799 = vld [vmem:[%s1798] sm:$0xf]
    %v1800 = vld [vmem:[%s1798 + $0x4] sm:$0xf]
    %v1801 = vld [vmem:[%s1798 + $0x8] sm:$0xf]
    %v1802 = vld [vmem:[%s1798 + $0xc] sm:$0xf]
    %v1803 = vld [vmem:[%s1798 + $0x10] sm:$0xf]
    %v1804 = vld [vmem:[%s1798 + $0x14] sm:$0xf]
    %v1805 = vld [vmem:[%s1798 + $0x18] sm:$0xf]
    %v1806 = vld [vmem:[%s1798 + $0x1c] sm:$0xf]
    %v1807 = vld [vmem:[%s1798 + $0x20] sm:$0xf]
    %v1808 = vld [vmem:[%s1798 + $0x24] sm:$0xf]
    %v1809 = vld [vmem:[%s1798 + $0x28] sm:$0xf]
    %v1810 = vld [vmem:[%s1798 + $0x2c] sm:$0xf]
    %v1811 = vld [vmem:[%s1798 + $0x30] sm:$0xf]
    %v1812 = vld [vmem:[%s1798 + $0x34] sm:$0xf]
    %v1813 = vld [vmem:[%s1798 + $0x38] sm:$0xf]
    %v1814 = vld [vmem:[%s1798 + $0x3c] sm:$0xf]
    %v1815 = vld [vmem:[%s1798 + $0x40] sm:$0xf]
    %v1816 = vld [vmem:[%s1798 + $0x44] sm:$0xf]
    %v1817 = vld [vmem:[%s1798 + $0x48] sm:$0xf]
    %v1818 = vld [vmem:[%s1798 + $0x4c] sm:$0xf]
    %v1819 = vld [vmem:[%s1798 + $0x50] sm:$0xf]
    %v1820 = vld [vmem:[%s1798 + $0x54] sm:$0xf]
    %v1821 = vld [vmem:[%s1798 + $0x58] sm:$0xf]
    %v1822 = vld [vmem:[%s1798 + $0x5c] sm:$0xf]
    %v1823 = vld [vmem:[%s1798 + $0x60] sm:$0xf]
    %v1824 = vld [vmem:[%s1798 + $0x64] sm:$0xf]
    %v1825 = vld [vmem:[%s1798 + $0x68] sm:$0xf]
    %v1826 = vld [vmem:[%s1798 + $0x6c] sm:$0xf]
    %v1827 = vld [vmem:[%s1798 + $0x70] sm:$0xf]
    %v1828 = vld [vmem:[%s1798 + $0x74] sm:$0xf]
    %v1829 = vld [vmem:[%s1798 + $0x78] sm:$0xf]
    %v1830 = vld [vmem:[%s1798 + $0x7c] sm:$0xf]
    %s1831 = scalar_lea.vmem %s14, 2
    %v1832 = vld [vmem:[%s1831] sm:$0x1]
    %v1834 = vlaneseq
    %v1835 = vshrl.u32 %v1834, 7
    %v1836 = vsub.s32 0, %v1835
    %v1837 = vrot.slane %v1832, %v1836
    %v1871 = vunpack.c.l.b16 %v1799
    %v1872 = vunpack.c.l.b16 %v1800
    %v1873 = vunpack.c.l.b16 %v1801
    %v1874 = vunpack.c.l.b16 %v1802
    %v1875 = vunpack.c.l.b16 %v1803
    %v1876 = vunpack.c.l.b16 %v1804
    %v1877 = vunpack.c.l.b16 %v1805
    %v1878 = vunpack.c.l.b16 %v1806
    %v1879 = vunpack.c.l.b16 %v1807
    %v1880 = vunpack.c.l.b16 %v1808
    %v1881 = vunpack.c.l.b16 %v1809
    %v1882 = vunpack.c.l.b16 %v1810
    %v1883 = vunpack.c.l.b16 %v1811
    %v1884 = vunpack.c.l.b16 %v1812
    %v1885 = vunpack.c.l.b16 %v1813
    %v1886 = vunpack.c.l.b16 %v1814
    %v1887 = vunpack.c.l.b16 %v1815
    %v1888 = vunpack.c.l.b16 %v1816
    %v1889 = vunpack.c.l.b16 %v1817
    %v1890 = vunpack.c.l.b16 %v1818
    %v1891 = vunpack.c.l.b16 %v1819
    %v1892 = vunpack.c.l.b16 %v1820
    %v1893 = vunpack.c.l.b16 %v1821
    %v1894 = vunpack.c.l.b16 %v1822
    %v1895 = vunpack.c.l.b16 %v1823
    %v1896 = vunpack.c.l.b16 %v1824
    %v1897 = vunpack.c.l.b16 %v1825
    %v1898 = vunpack.c.l.b16 %v1826
    %v1899 = vunpack.c.l.b16 %v1827
    %v1900 = vunpack.c.l.b16 %v1828
    %v1901 = vunpack.c.l.b16 %v1829
    %v1902 = vunpack.c.l.b16 %v1830
    %v1903 = vpack.c.b16 %v1872, %v1871
    %v1904 = vpack.c.b16 %v1874, %v1873
    %v1905 = vpack.c.b16 %v1876, %v1875
    %v1906 = vpack.c.b16 %v1878, %v1877
    %v1907 = vpack.c.b16 %v1880, %v1879
    %v1908 = vpack.c.b16 %v1882, %v1881
    %v1909 = vpack.c.b16 %v1884, %v1883
    %v1910 = vpack.c.b16 %v1886, %v1885
    %v1911 = vpack.c.b16 %v1888, %v1887
    %v1912 = vpack.c.b16 %v1890, %v1889
    %v1913 = vpack.c.b16 %v1892, %v1891
    %v1914 = vpack.c.b16 %v1894, %v1893
    %v1915 = vpack.c.b16 %v1896, %v1895
    %v1916 = vpack.c.b16 %v1898, %v1897
    %v1917 = vpack.c.b16 %v1900, %v1899
    %v1918 = vpack.c.b16 %v1902, %v1901
    %1935 = vmatprep.subr.bf16.mxu0 0
    %1936 = vmatpush1.bf16.msra.mxu0 %v1910
    %1937 = vmatprep.subr.bf16.mxu0 0
    %1938 = vmatpush1.bf16.msra.mxu0 %v1909
    %1939 = vmatprep.subr.bf16.mxu0 0
    %1940 = vmatpush1.bf16.msra.mxu0 %v1908
    %1941 = vmatprep.subr.bf16.mxu0 0
    %1942 = vmatpush1.bf16.msra.mxu0 %v1907
    %1943 = vmatprep.subr.bf16.mxu0 0
    %1944 = vmatpush1.bf16.msra.mxu0 %v1906
    %1945 = vmatprep.subr.bf16.mxu0 0
    %1946 = vmatpush1.bf16.msra.mxu0 %v1905
    %1947 = vmatprep.subr.bf16.mxu0 0
    %1948 = vmatpush1.bf16.msra.mxu0 %v1904
    %1949 = vmatprep.subr.bf16.mxu0 0
    %1950 = vmatpush1.bf16.msra.mxu0 %v1903
    %1951 = vmatprep.subr.bf16.mxu0 0
    %1952 = vmatpush2.bf16.msra.mxu0 %v1918
    %1953 = vmatprep.subr.bf16.mxu0 0
    %1954 = vmatpush2.bf16.msra.mxu0 %v1917
    %1955 = vmatprep.subr.bf16.mxu0 0
    %1956 = vmatpush2.bf16.msra.mxu0 %v1916
    %1957 = vmatprep.subr.bf16.mxu0 0
    %1958 = vmatpush2.bf16.msra.mxu0 %v1915
    %1959 = vmatprep.subr.bf16.mxu0 0
    %1960 = vmatpush2.bf16.msra.mxu0 %v1914
    %1961 = vmatprep.subr.bf16.mxu0 0
    %1962 = vmatpush2.bf16.msra.mxu0 %v1913
    %1963 = vmatprep.subr.bf16.mxu0 0
    %1964 = vmatpush2.bf16.msra.mxu0 %v1912
    %1965 = vmatprep.subr.bf16.mxu0 0
    %1966 = vmatpush2.bf16.msra.mxu0 %v1911
    %1967 = vmatprep.mubr.bf16.mxu0 %v1797
    %1968 = vmatmul.mubr.bf16.gmra.mxu0 %v1796
    %v1969 = vpop.f32.mrf.mxu0
    %v1970 = vadd.f32 %v1837, %v1969
    %v1971 = vpop.f32.mrf.mxu0
    %v1972 = vpop.f32.mrf.mxu0
    %v1973 = vadd.f32 %v1837, %v1972
    %v1974 = vpop.f32.mrf.mxu0
    %1975 = vdwg.mxu0
    %v1976 = vadd.f32 %v1611, %v1970
    %v1977 = vadd.f32 %v1612, %v1973
    %s1978 = scalar_lea.vmem %s9, 3
    %v1979 = vld [vmem:[%s1978] sm:$0x1]
    %s1980 = scalar_lea.vmem %s10, 3
    %v1981 = vld [vmem:[%s1980] sm:$0x1]
    %v1982 = vsel %vm889, %v1976, 0.0
    %1983 = vadd.xlane.f32.xlu0 %v1982
    %v1984 = vpop.xlane.xlu0 %1983
    %v1985 = vsel %vm889, %v1977, 0.0
    %1986 = vadd.xlane.f32.xlu0 %v1985
    %v1987 = vpop.xlane.xlu0 %1986
    %v1988 = vmul.f32 %v1984, %v896
    %v1989 = vmul.f32 %v1987, %v896
    %v1990 = vsub.f32 %v1976, %v1988
    %v1991 = vsub.f32 %v1977, %v1989
    %v1992 = vmul.f32 %v1990, %v1990
    %v1993 = vmul.f32 %v1991, %v1991
    %v1994 = vsel %vm889, %v1992, 0.0
    %1995 = vadd.xlane.f32.xlu0 %v1994
    %v1996 = vpop.xlane.xlu0 %1995
    %v1997 = vsel %vm889, %v1993, 0.0
    %1998 = vadd.xlane.f32.xlu0 %v1997
    %v1999 = vpop.xlane.xlu0 %1998
    %v2000 = vmul.f32 %v1996, %v896
    %v2001 = vmul.f32 %v1999, %v896
    %v2002 = vadd.f32 %v2000, 1e-05
    %v2003 = vadd.f32 %v2001, 1e-05
    %v2004 = vrsqrt.pop %v2002
    %v2005 = vrsqrt.pop %v2003
    %v2006 = vmul.f32 %v1990, %v2004
    %v2007 = vmul.f32 %v1991, %v2005
    %v2009 = vlaneseq
    %v2010 = vshrl.u32 %v2009, 7
    %v2011 = vsub.s32 0, %v2010
    %v2012 = vrot.slane %v1979, %v2011
    %v2014 = vmul.f32 %v2006, %v2012
    %v2015 = vmul.f32 %v2007, %v2012
    %v2017 = vlaneseq
    %v2018 = vshrl.u32 %v2017, 7
    %v2019 = vsub.s32 0, %v2018
    %v2020 = vrot.slane %v1981, %v2019
    %v2022 = vadd.f32 %v2014, %v2020
    %v2023 = vadd.f32 %v2015, %v2020
    %v2024 = vpack.c.bf16 %v2023, %v2022
    %s2025 = scalar_lea.vmem %s11, 192
    %v2026 = vld [vmem:[%s2025] sm:$0xff]
    %v2027 = vld [vmem:[%s2025 + $0x8] sm:$0xff]
    %v2028 = vld [vmem:[%s2025 + $0x10] sm:$0xff]
    %v2029 = vld [vmem:[%s2025 + $0x18] sm:$0xff]
    %v2030 = vld [vmem:[%s2025 + $0x20] sm:$0xff]
    %v2031 = vld [vmem:[%s2025 + $0x28] sm:$0xff]
    %v2032 = vld [vmem:[%s2025 + $0x30] sm:$0xff]
    %v2033 = vld [vmem:[%s2025 + $0x38] sm:$0xff]
    %s2034 = scalar_lea.vmem %s12, 6
    %v2035 = vld [vmem:[%s2034] sm:$0x3]
    %v2037 = vlaneseq
    %v2038 = vshrl.u32 %v2037, 7
    %v2039 = vsub.s32 0, %v2038
    %v2040 = vrot.slane %v2035, %v2039
    %v2041 = vlaneseq
    %v2042 = vshrl.u32 %v2041, 7
    %v2043 = vsub.s32 1, %v2042
    %v2044 = vrot.slane %v2035, %v2043
    %v2055 = vunpack.c.l.b16 %v2026
    %v2056 = vunpack.c.h.b16 %v2026
    %v2057 = vunpack.c.l.b16 %v2027
    %v2058 = vunpack.c.h.b16 %v2027
    %v2059 = vunpack.c.l.b16 %v2028
    %v2060 = vunpack.c.h.b16 %v2028
    %v2061 = vunpack.c.l.b16 %v2029
    %v2062 = vunpack.c.h.b16 %v2029
    %v2063 = vunpack.c.l.b16 %v2030
    %v2064 = vunpack.c.h.b16 %v2030
    %v2065 = vunpack.c.l.b16 %v2031
    %v2066 = vunpack.c.h.b16 %v2031
    %v2067 = vunpack.c.l.b16 %v2032
    %v2068 = vunpack.c.h.b16 %v2032
    %v2069 = vunpack.c.l.b16 %v2033
    %v2070 = vunpack.c.h.b16 %v2033
    %v2071 = vpack.c.b16 %v2057, %v2055
    %v2072 = vpack.c.b16 %v2058, %v2056
    %v2073 = vpack.c.b16 %v2061, %v2059
    %v2074 = vpack.c.b16 %v2062, %v2060
    %v2075 = vpack.c.b16 %v2065, %v2063
    %v2076 = vpack.c.b16 %v2066, %v2064
    %v2077 = vpack.c.b16 %v2069, %v2067
    %v2078 = vpack.c.b16 %v2070, %v2068
    %v2088 = vsel %vm889, %v2024, 0
    %2090 = vmatprep.subr.bf16.mxu0 0
    %2091 = vmatpush1.bf16.msra.mxu0 0
    %2092 = vmatprep.subr.bf16.mxu0 0
    %2093 = vmatpush1.bf16.msra.mxu0 0
    %2094 = vmatprep.subr.bf16.mxu0 0
    %2095 = vmatpush1.bf16.msra.mxu0 0
    %2096 = vmatprep.subr.bf16.mxu0 0
    %2097 = vmatpush1.bf16.msra.mxu0 0
    %2098 = vmatprep.subr.bf16.mxu0 %v2078
    %2099 = vmatpush1.bf16.msra.mxu0 %v2077
    %2100 = vmatprep.subr.bf16.mxu0 %v2076
    %2101 = vmatpush1.bf16.msra.mxu0 %v2075
    %2102 = vmatprep.subr.bf16.mxu0 %v2074
    %2103 = vmatpush1.bf16.msra.mxu0 %v2073
    %2104 = vmatprep.subr.bf16.mxu0 %v2072
    %2105 = vmatpush1.bf16.msra.mxu0 %v2071
    %2106 = vmatprep.subr.bf16.mxu0 0
    %2107 = vmatpush2.bf16.msra.mxu0 0
    %2108 = vmatprep.subr.bf16.mxu0 0
    %2109 = vmatpush2.bf16.msra.mxu0 0
    %2110 = vmatprep.subr.bf16.mxu0 0
    %2111 = vmatpush2.bf16.msra.mxu0 0
    %2112 = vmatprep.subr.bf16.mxu0 0
    %2113 = vmatpush2.bf16.msra.mxu0 0
    %2114 = vmatprep.subr.bf16.mxu0 0
    %2115 = vmatpush2.bf16.msra.mxu0 0
    %2116 = vmatprep.subr.bf16.mxu0 0
    %2117 = vmatpush2.bf16.msra.mxu0 0
    %2118 = vmatprep.subr.bf16.mxu0 0
    %2119 = vmatpush2.bf16.msra.mxu0 0
    %2120 = vmatprep.subr.bf16.mxu0 0
    %2121 = vmatpush2.bf16.msra.mxu0 0
    %2122 = vmatprep.mubr.bf16.mxu0 0
    %2123 = vmatmul.mubr.bf16.gmra.mxu0 %v2088
    %v2124 = vpop.f32.mrf.mxu0
    %v2125 = vadd.f32 %v2040, %v2124
    %v2126 = vpop.f32.mrf.mxu0
    %v2127 = vadd.f32 %v2044, %v2126
    %v2128 = vpop.f32.mrf.mxu0
    %v2129 = vadd.f32 %v2040, %v2128
    %v2130 = vpop.f32.mrf.mxu0
    %v2131 = vadd.f32 %v2044, %v2130
    %2132 = vdwg.mxu0
    %v2133 = vxor.u32 %v2125, 2147483648
    %v2134 = vxor.u32 %v2127, 2147483648
    %v2135 = vxor.u32 %v2129, 2147483648
    %v2136 = vxor.u32 %v2131, 2147483648
    %v2137 = vmul.f32 %v2133, 1.442695
    %v2138 = vpow.pop %v2137
    %v2139 = vmul.f32 %v2134, 1.442695
    %v2140 = vpow.pop %v2139
    %v2141 = vmul.f32 %v2135, 1.442695
    %v2142 = vpow.pop %v2141
    %v2143 = vmul.f32 %v2136, 1.442695
    %v2144 = vpow.pop %v2143
    %v2145 = vadd.f32 %v2138, 1.0
    %v2146 = vadd.f32 %v2140, 1.0
    %v2147 = vadd.f32 %v2142, 1.0
    %v2148 = vadd.f32 %v2144, 1.0
    %v2149 = vrcp.pop %v2145
    %v2150 = vmul.f32 1.0, %v2149
    %v2151 = vrcp.pop %v2146
    %v2152 = vmul.f32 1.0, %v2151
    %v2153 = vrcp.pop %v2147
    %v2154 = vmul.f32 1.0, %v2153
    %v2155 = vrcp.pop %v2148
    %v2156 = vmul.f32 1.0, %v2155
    %v2157 = vmul.f32 %v2125, %v2150
    %v2158 = vmul.f32 %v2127, %v2152
    %v2159 = vmul.f32 %v2129, %v2154
    %v2160 = vmul.f32 %v2131, %v2156
    %v2161 = vpack.c.bf16 %v2159, %v2157
    %v2162 = vpack.c.bf16 %v2160, %v2158
    %s2163 = scalar_lea.vmem %s13, 384
    %v2164 = vld [vmem:[%s2163] sm:$0xf]
    %v2165 = vld [vmem:[%s2163 + $0x4] sm:$0xf]
    %v2166 = vld [vmem:[%s2163 + $0x8] sm:$0xf]
    %v2167 = vld [vmem:[%s2163 + $0xc] sm:$0xf]
    %v2168 = vld [vmem:[%s2163 + $0x10] sm:$0xf]
    %v2169 = vld [vmem:[%s2163 + $0x14] sm:$0xf]
    %v2170 = vld [vmem:[%s2163 + $0x18] sm:$0xf]
    %v2171 = vld [vmem:[%s2163 + $0x1c] sm:$0xf]
    %v2172 = vld [vmem:[%s2163 + $0x20] sm:$0xf]
    %v2173 = vld [vmem:[%s2163 + $0x24] sm:$0xf]
    %v2174 = vld [vmem:[%s2163 + $0x28] sm:$0xf]
    %v2175 = vld [vmem:[%s2163 + $0x2c] sm:$0xf]
    %v2176 = vld [vmem:[%s2163 + $0x30] sm:$0xf]
    %v2177 = vld [vmem:[%s2163 + $0x34] sm:$0xf]
    %v2178 = vld [vmem:[%s2163 + $0x38] sm:$0xf]
    %v2179 = vld [vmem:[%s2163 + $0x3c] sm:$0xf]
    %v2180 = vld [vmem:[%s2163 + $0x40] sm:$0xf]
    %v2181 = vld [vmem:[%s2163 + $0x44] sm:$0xf]
    %v2182 = vld [vmem:[%s2163 + $0x48] sm:$0xf]
    %v2183 = vld [vmem:[%s2163 + $0x4c] sm:$0xf]
    %v2184 = vld [vmem:[%s2163 + $0x50] sm:$0xf]
    %v2185 = vld [vmem:[%s2163 + $0x54] sm:$0xf]
    %v2186 = vld [vmem:[%s2163 + $0x58] sm:$0xf]
    %v2187 = vld [vmem:[%s2163 + $0x5c] sm:$0xf]
    %v2188 = vld [vmem:[%s2163 + $0x60] sm:$0xf]
    %v2189 = vld [vmem:[%s2163 + $0x64] sm:$0xf]
    %v2190 = vld [vmem:[%s2163 + $0x68] sm:$0xf]
    %v2191 = vld [vmem:[%s2163 + $0x6c] sm:$0xf]
    %v2192 = vld [vmem:[%s2163 + $0x70] sm:$0xf]
    %v2193 = vld [vmem:[%s2163 + $0x74] sm:$0xf]
    %v2194 = vld [vmem:[%s2163 + $0x78] sm:$0xf]
    %v2195 = vld [vmem:[%s2163 + $0x7c] sm:$0xf]
    %s2196 = scalar_lea.vmem %s14, 3
    %v2197 = vld [vmem:[%s2196] sm:$0x1]
    %v2199 = vlaneseq
    %v2200 = vshrl.u32 %v2199, 7
    %v2201 = vsub.s32 0, %v2200
    %v2202 = vrot.slane %v2197, %v2201
    %v2236 = vunpack.c.l.b16 %v2164
    %v2237 = vunpack.c.l.b16 %v2165
    %v2238 = vunpack.c.l.b16 %v2166
    %v2239 = vunpack.c.l.b16 %v2167
    %v2240 = vunpack.c.l.b16 %v2168
    %v2241 = vunpack.c.l.b16 %v2169
    %v2242 = vunpack.c.l.b16 %v2170
    %v2243 = vunpack.c.l.b16 %v2171
    %v2244 = vunpack.c.l.b16 %v2172
    %v2245 = vunpack.c.l.b16 %v2173
    %v2246 = vunpack.c.l.b16 %v2174
    %v2247 = vunpack.c.l.b16 %v2175
    %v2248 = vunpack.c.l.b16 %v2176
    %v2249 = vunpack.c.l.b16 %v2177
    %v2250 = vunpack.c.l.b16 %v2178
    %v2251 = vunpack.c.l.b16 %v2179
    %v2252 = vunpack.c.l.b16 %v2180
    %v2253 = vunpack.c.l.b16 %v2181
    %v2254 = vunpack.c.l.b16 %v2182
    %v2255 = vunpack.c.l.b16 %v2183
    %v2256 = vunpack.c.l.b16 %v2184
    %v2257 = vunpack.c.l.b16 %v2185
    %v2258 = vunpack.c.l.b16 %v2186
    %v2259 = vunpack.c.l.b16 %v2187
    %v2260 = vunpack.c.l.b16 %v2188
    %v2261 = vunpack.c.l.b16 %v2189
    %v2262 = vunpack.c.l.b16 %v2190
    %v2263 = vunpack.c.l.b16 %v2191
    %v2264 = vunpack.c.l.b16 %v2192
    %v2265 = vunpack.c.l.b16 %v2193
    %v2266 = vunpack.c.l.b16 %v2194
    %v2267 = vunpack.c.l.b16 %v2195
    %v2268 = vpack.c.b16 %v2237, %v2236
    %v2269 = vpack.c.b16 %v2239, %v2238
    %v2270 = vpack.c.b16 %v2241, %v2240
    %v2271 = vpack.c.b16 %v2243, %v2242
    %v2272 = vpack.c.b16 %v2245, %v2244
    %v2273 = vpack.c.b16 %v2247, %v2246
    %v2274 = vpack.c.b16 %v2249, %v2248
    %v2275 = vpack.c.b16 %v2251, %v2250
    %v2276 = vpack.c.b16 %v2253, %v2252
    %v2277 = vpack.c.b16 %v2255, %v2254
    %v2278 = vpack.c.b16 %v2257, %v2256
    %v2279 = vpack.c.b16 %v2259, %v2258
    %v2280 = vpack.c.b16 %v2261, %v2260
    %v2281 = vpack.c.b16 %v2263, %v2262
    %v2282 = vpack.c.b16 %v2265, %v2264
    %v2283 = vpack.c.b16 %v2267, %v2266
    %2300 = vmatprep.subr.bf16.mxu0 0
    %2301 = vmatpush1.bf16.msra.mxu0 %v2275
    %2302 = vmatprep.subr.bf16.mxu0 0
    %2303 = vmatpush1.bf16.msra.mxu0 %v2274
    %2304 = vmatprep.subr.bf16.mxu0 0
    %2305 = vmatpush1.bf16.msra.mxu0 %v2273
    %2306 = vmatprep.subr.bf16.mxu0 0
    %2307 = vmatpush1.bf16.msra.mxu0 %v2272
    %2308 = vmatprep.subr.bf16.mxu0 0
    %2309 = vmatpush1.bf16.msra.mxu0 %v2271
    %2310 = vmatprep.subr.bf16.mxu0 0
    %2311 = vmatpush1.bf16.msra.mxu0 %v2270
    %2312 = vmatprep.subr.bf16.mxu0 0
    %2313 = vmatpush1.bf16.msra.mxu0 %v2269
    %2314 = vmatprep.subr.bf16.mxu0 0
    %2315 = vmatpush1.bf16.msra.mxu0 %v2268
    %2316 = vmatprep.subr.bf16.mxu0 0
    %2317 = vmatpush2.bf16.msra.mxu0 %v2283
    %2318 = vmatprep.subr.bf16.mxu0 0
    %2319 = vmatpush2.bf16.msra.mxu0 %v2282
    %2320 = vmatprep.subr.bf16.mxu0 0
    %2321 = vmatpush2.bf16.msra.mxu0 %v2281
    %2322 = vmatprep.subr.bf16.mxu0 0
    %2323 = vmatpush2.bf16.msra.mxu0 %v2280
    %2324 = vmatprep.subr.bf16.mxu0 0
    %2325 = vmatpush2.bf16.msra.mxu0 %v2279
    %2326 = vmatprep.subr.bf16.mxu0 0
    %2327 = vmatpush2.bf16.msra.mxu0 %v2278
    %2328 = vmatprep.subr.bf16.mxu0 0
    %2329 = vmatpush2.bf16.msra.mxu0 %v2277
    %2330 = vmatprep.subr.bf16.mxu0 0
    %2331 = vmatpush2.bf16.msra.mxu0 %v2276
    %2332 = vmatprep.mubr.bf16.mxu0 %v2162
    %2333 = vmatmul.mubr.bf16.gmra.mxu0 %v2161
    %v2334 = vpop.f32.mrf.mxu0
    %v2335 = vadd.f32 %v2202, %v2334
    %v2336 = vpop.f32.mrf.mxu0
    %v2337 = vpop.f32.mrf.mxu0
    %v2338 = vadd.f32 %v2202, %v2337
    %v2339 = vpop.f32.mrf.mxu0
    %2340 = vdwg.mxu0
    %v2341 = vadd.f32 %v1976, %v2335
    %v2342 = vadd.f32 %v1977, %v2338
    %v2343 = vxor.u32 %v2341, 2147483648
    %v2344 = vxor.u32 %v2342, 2147483648
    %v2345 = vmul.f32 %v2343, 1.442695
    %v2346 = vpow.pop %v2345
    %v2347 = vmul.f32 %v2344, 1.442695
    %v2348 = vpow.pop %v2347
    %v2349 = vadd.f32 %v2346, 1.0
    %v2350 = vadd.f32 %v2348, 1.0
    %v2351 = vrcp.pop %v2349
    %v2352 = vmul.f32 1.0, %v2351
    %v2353 = vrcp.pop %v2350
    %v2354 = vmul.f32 1.0, %v2353
    %v2355 = vmul.f32 %v2341, %v2352
    %v2356 = vmul.f32 %v2342, %v2354
    %v2357 = vpack.c.bf16 %v2356, %v2355
    %v2358 = vld [vmem:[%s15] sm:$0xf]
    %v2359 = vld [vmem:[%s15 + $0x4] sm:$0xf]
    %v2360 = vld [vmem:[%s15 + $0x8] sm:$0xf]
    %v2361 = vld [vmem:[%s15 + $0xc] sm:$0xf]
    %v2362 = vld [vmem:[%s15 + $0x10] sm:$0xf]
    %v2363 = vld [vmem:[%s15 + $0x14] sm:$0xf]
    %v2364 = vld [vmem:[%s15 + $0x18] sm:$0xf]
    %v2365 = vld [vmem:[%s15 + $0x1c] sm:$0xf]
    %v2366 = vld [vmem:[%s16] sm:$0x1]
    %v2368 = vlaneseq
    %v2369 = vshrl.u32 %v2368, 7
    %v2370 = vsub.s32 0, %v2369
    %v2371 = vrot.slane %v2366, %v2370
    %v2381 = vunpack.c.l.b16 %v2358
    %v2382 = vunpack.c.l.b16 %v2359
    %v2383 = vunpack.c.l.b16 %v2360
    %v2384 = vunpack.c.l.b16 %v2361
    %v2385 = vunpack.c.l.b16 %v2362
    %v2386 = vunpack.c.l.b16 %v2363
    %v2387 = vunpack.c.l.b16 %v2364
    %v2388 = vunpack.c.l.b16 %v2365
    %v2389 = vpack.c.b16 %v2382, %v2381
    %v2390 = vpack.c.b16 %v2384, %v2383
    %v2391 = vpack.c.b16 %v2386, %v2385
    %v2392 = vpack.c.b16 %v2388, %v2387
    %v2398 = vsel %vm889, %v2357, 0
    %2400 = vmatprep.subr.bf16.mxu0 0
    %2401 = vmatpush1.bf16.msra.mxu0 0
    %2402 = vmatprep.subr.bf16.mxu0 0
    %2403 = vmatpush1.bf16.msra.mxu0 0
    %2404 = vmatprep.subr.bf16.mxu0 0
    %2405 = vmatpush1.bf16.msra.mxu0 0
    %2406 = vmatprep.subr.bf16.mxu0 0
    %2407 = vmatpush1.bf16.msra.mxu0 0
    %2408 = vmatprep.subr.bf16.mxu0 0
    %2409 = vmatpush1.bf16.msra.mxu0 %v2392
    %2410 = vmatprep.subr.bf16.mxu0 0
    %2411 = vmatpush1.bf16.msra.mxu0 %v2391
    %2412 = vmatprep.subr.bf16.mxu0 0
    %2413 = vmatpush1.bf16.msra.mxu0 %v2390
    %2414 = vmatprep.subr.bf16.mxu0 0
    %2415 = vmatpush1.bf16.msra.mxu0 %v2389
    %2416 = vmatprep.subr.bf16.mxu0 0
    %2417 = vmatpush2.bf16.msra.mxu0 0
    %2418 = vmatprep.subr.bf16.mxu0 0
    %2419 = vmatpush2.bf16.msra.mxu0 0
    %2420 = vmatprep.subr.bf16.mxu0 0
    %2421 = vmatpush2.bf16.msra.mxu0 0
    %2422 = vmatprep.subr.bf16.mxu0 0
    %2423 = vmatpush2.bf16.msra.mxu0 0
    %2424 = vmatprep.subr.bf16.mxu0 0
    %2425 = vmatpush2.bf16.msra.mxu0 0
    %2426 = vmatprep.subr.bf16.mxu0 0
    %2427 = vmatpush2.bf16.msra.mxu0 0
    %2428 = vmatprep.subr.bf16.mxu0 0
    %2429 = vmatpush2.bf16.msra.mxu0 0
    %2430 = vmatprep.subr.bf16.mxu0 0
    %2431 = vmatpush2.bf16.msra.mxu0 0
    %2432 = vmatprep.mubr.bf16.mxu0 0
    %2433 = vmatmul.mubr.bf16.gmra.mxu0 %v2398
    %v2434 = vpop.f32.mrf.mxu0
    %v2435 = vadd.f32 %v2371, %v2434
    %v2436 = vpop.f32.mrf.mxu0
    %v2437 = vpop.f32.mrf.mxu0
    %v2438 = vadd.f32 %v2371, %v2437
    %v2439 = vpop.f32.mrf.mxu0
    %2440 = vdwg.mxu0
    %2441 = vst.msk [vmem:[#allocation2] sm:$0xff] %vm505, %v2435
    %2442 = vst.msk [vmem:[#allocation2 + $0x8] sm:$0xff] %vm505, %v2438
    // Predicated region
    $region70: #{tpu_custom_call.1} parent=1 // pred_check
      _
    $region71: #{tpu_custom_call.1} parent=1 // pred_check_branch
      %2444 = sbr.rel (0) target = $region73
    $region72: #{tpu_custom_call.1} parent=1 // pred_region
      %s2446 = ssub.s32 256, 256
      %2447 = vsyncadd [#allocation3], %s2446
      %s2448 = sshll.u32 [#allocation2], 4
      %s2449 = int_to_ptr.vmem [resolvable:$true] %s2448
      %2454 = dma.vmem_to_hbm [thread:$0]  %s2449, 256, %s17, [#allocation3], 128, 128, 8
    $region73: #{tpu_custom_call.1} parent=1 // pred_fallthru
      _
    // Predicated region
    $region74: #{tpu_custom_call.1} parent=1 // pred_check
      _
    $region75: #{tpu_custom_call.1} parent=1 // pred_check_branch
      %2456 = sbr.rel (0) target = $region77
    $region76: #{tpu_custom_call.1} parent=1 // pred_region
      %2457 = dma.done [#allocation3], 256
    $region77: #{tpu_custom_call.1} parent=1 // pred_fallthru
      _
    %2458 = vsyncpa [#allocation3], 1

</llo_original>
